<compile_context>
chip_gen: v7x
topology: tpu7x:2x2x1
jax: 0.10.0
libtpu: 0.0.40
codegen_flags: <defaults>
</compile_context>

<pallas_src>
import functools

import jax
import jax.numpy as jnp
from jax.experimental import pallas as pl
from jax.experimental.pallas import tpu as pltpu

LANES = 128


def _mha_kernel(x_ref, wqkv_ref, wo_ref, out_ref, *,
                B: int, S: int, H: int, D: int, causal_mask: bool):
    """Fused multi-head attention, single invocation (no grid).

    x_ref:    (N, E+1)    f32  flattened (B*S) activations + ones lane
    wqkv_ref: (H, E+1, 3D) f32 per-head [Wq^T | Wk^T | Wv^T] + bias row (row E)
    wo_ref:   (E+1, 128)  f32  rows [0:E] = Wo^T (lane-padded), row E = bo
    out_ref:  (N, 128)    f32  lane-dense output; caller slices [:, :E]
    """
    E = H * D
    N = B * S
    HB = H * B

    x = x_ref[...]                                               # (N, E+1)

    # Fused, bias-folded Q/K/V projection, batched over heads.
    xb = jnp.broadcast_to(x[None, :, :], (H, N, x.shape[-1]))    # (H, N, E+1)
    qkv = jnp.einsum('hne,hef->hnf', xb, wqkv_ref[...],
                     preferred_element_type=jnp.float32)         # (H, N, 3D)

    # Leading-dim reshapes only: (H, B*S, D) -> (H*B, S, D).
    q = qkv[:, :, 0 * D:1 * D].reshape(HB, S, D)
    k = qkv[:, :, 1 * D:2 * D].reshape(HB, S, D)
    v = qkv[:, :, 2 * D:3 * D].reshape(HB, S, D)

    # Attention: one batched score matmul + ONE softmax over all heads.
    # NOTE: reference does NOT scale scores by 1/sqrt(D) -- reproduced exactly.
    s = jnp.einsum('nqd,nkd->nqk', q, k,
                   preferred_element_type=jnp.float32)           # (HB, S, S)

    if causal_mask:
        # Exact PyTorch semantics: masked_fill where tril(ones) is True
        # (inverted vs. standard causal; produces NaN rows like the reference).
        rows = jax.lax.broadcasted_iota(jnp.int32, (1, S, S), 1)
        cols = jax.lax.broadcasted_iota(jnp.int32, (1, S, S), 2)
        s = jnp.where(cols <= rows, -jnp.inf, s)

    m = jnp.max(s, axis=-1, keepdims=True)
    p = jnp.exp(s - m)
    denom = jnp.sum(p, axis=-1, keepdims=True)                   # in [1, S]
    r = pl.reciprocal(denom, approx=True)                        # EUP slot
    r = r * (2.0 - denom * r)                                    # Newton step -> f32 accuracy
    w = p * r

    ctx = jnp.einsum('nqk,nkd->nqd', w, v,
                     preferred_element_type=jnp.float32)         # (HB, S, D)

    # Output projection, batched over heads (no lane concatenate).
    ctx_h = ctx.reshape(H, N, D)                                 # (H, N, D)
    wo_h = wo_ref[0:E, :].reshape(H, D, LANES)                   # (H, D, 128)
    bo = wo_ref[E:E + 1, :]                                      # (1, 128)
    y_h = jnp.einsum('hnd,hdf->hnf', ctx_h, wo_h,
                     preferred_element_type=jnp.float32)         # (H, N, 128)

    acc = y_h[0]
    for h in range(1, H):                                        # static unroll, VPU adds
        acc = acc + y_h[h]

    out_ref[...] = (acc + bo).astype(out_ref.dtype)


def multi_head_attention(hidden_states, params, *, causal_mask: bool = False):
    """hidden_states: (B, S, E). params: dict with stacked per-head weights."""
    B, S, E = hidden_states.shape
    wq, wk, wv = params['wq'], params['wk'], params['wv']        # (H, D, E)
    H, D, _ = wq.shape
    assert H * D == E
    N = B * S
    f32 = jnp.float32

    # ---- layout plumbing (wrapper-side, free) ----
    # x with a ones lane appended -> folds the q/k/v biases into the matmul.
    x_flat = hidden_states.reshape(N, E).astype(f32)
    x_aug = jnp.concatenate([x_flat, jnp.ones((N, 1), f32)], axis=1)          # (N, E+1)

    # PyTorch Linear stores W as (out, in): y = x @ W^T + b.
    w_qkv = jnp.concatenate([jnp.transpose(wq, (0, 2, 1)),
                             jnp.transpose(wk, (0, 2, 1)),
                             jnp.transpose(wv, (0, 2, 1))], axis=-1)          # (H, E, 3D)
    b_qkv = jnp.concatenate([params['bq'], params['bk'], params['bv']],
                            axis=-1)                                          # (H, 3D)
    w_qkv_aug = jnp.concatenate([w_qkv, b_qkv[:, None, :]],
                                axis=1).astype(f32)                           # (H, E+1, 3D)

    # Wo^T lane-padded to 128, with the output bias packed as the last row.
    wo_t = params['wo'].T.astype(f32)                                         # (E, E)
    wo_pad = jnp.zeros((E, LANES), f32).at[:, :E].set(wo_t)
    bo_pad = jnp.zeros((1, LANES), f32).at[:, :E].set(
        params['bo'].reshape(1, E).astype(f32))
    wo_pack = jnp.concatenate([wo_pad, bo_pad], axis=0)                       # (E+1, 128)

    kernel = functools.partial(_mha_kernel, B=B, S=S, H=H, D=D,
                               causal_mask=causal_mask)

    vmem_spec = pl.BlockSpec(memory_space=pltpu.MemorySpace.VMEM)
    out = pl.pallas_call(
        kernel,
        out_shape=jax.ShapeDtypeStruct((N, LANES), hidden_states.dtype),
        in_specs=[vmem_spec, vmem_spec, vmem_spec],
        out_specs=vmem_spec,
    )(x_aug, w_qkv_aug, wo_pack)

    return out[:, :E].reshape(B, S, E)


def multi_head_attention_ref(x, params, *, causal_mask: bool = False):
    """Pure-JAX reference matching the PyTorch module."""
    H, D, E = params['wq'].shape
    outs = []
    for h in range(H):
        q = x @ params['wq'][h].T + params['bq'][h]
        k = x @ params['wk'][h].T + params['bk'][h]
        v = x @ params['wv'][h].T + params['bv'][h]
        s = jnp.einsum('bqd,bkd->bqk', q, k)
        if causal_mask:
            S = s.shape[-1]
            tril = jnp.tril(jnp.ones((S, S), dtype=bool))
            s = jnp.where(tril[None], -jnp.inf, s)
        w = jax.nn.softmax(s, axis=-1)
        outs.append(jnp.einsum('bqk,bkd->bqd', w, v))
    cat = jnp.concatenate(outs, axis=-1)
    return cat @ params['wo'].T + params['bo'][0]


def init_params(key, embed_dim, num_heads):
    head_dim = embed_dim // num_heads
    ks = jax.random.split(key, 8)
    scale = 1.0 / jnp.sqrt(embed_dim)
    return {
        'wq': jax.random.normal(ks[0], (num_heads, head_dim, embed_dim), jnp.float32) * scale,
        'bq': jax.random.normal(ks[1], (num_heads, head_dim), jnp.float32) * 0.01,
        'wk': jax.random.normal(ks[2], (num_heads, head_dim, embed_dim), jnp.float32) * scale,
        'bk': jax.random.normal(ks[3], (num_heads, head_dim), jnp.float32) * 0.01,
        'wv': jax.random.normal(ks[4], (num_heads, head_dim, embed_dim), jnp.float32) * scale,
        'bv': jax.random.normal(ks[5], (num_heads, head_dim), jnp.float32) * 0.01,
        'wo': jax.random.normal(ks[6], (embed_dim, embed_dim), jnp.float32) * scale,
        'bo': jax.random.normal(ks[7], (1, embed_dim), jnp.float32) * 0.01,
    }


if __name__ == "__main__":
    # config = {'hidden_size': 32, 'num_attention_heads': 4}
    B, S, E, H = 2, 8, 32, 4
    key = jax.random.PRNGKey(0)
    k_x, k_p = jax.random.split(key)
    x = jax.random.normal(k_x, (B, S, E), jnp.float32)
    params = init_params(k_p, E, H)

    # mask=True reproduces PyTorch's (inverted) tril masked_fill, which yields
    # NaN rows just like the reference; default mask=False is exercised here.
    out = multi_head_attention(x, params, causal_mask=False)
    out = jax.block_until_ready(out)

    ref = multi_head_attention_ref(x, params, causal_mask=False)
    assert out.shape == (B, S, E)
    assert jnp.allclose(out, ref, rtol=1e-4, atol=1e-4), float(jnp.abs(out - ref).max())

    print("KERNEL_OK")
</pallas_src>

<mosaic_0001>
module attributes {stable_mosaic.version = 11 : i64} {
  func.func @_mha_kernel(%arg0: memref<16x33xf32, #tpu.memory_space<vmem>>, %arg1: memref<4x33x24xf32, #tpu.memory_space<vmem>>, %arg2: memref<33x128xf32, #tpu.memory_space<vmem>>, %arg3: memref<16x128xf32, #tpu.memory_space<vmem>>) attributes {dimension_semantics = [], scalar_prefetch = 0 : i64, scratch_operands = 0 : i64, tpu.core_type = #tpu.core_type<tc>} {
    %c0 = arith.constant 0 : index
    %c0_0 = arith.constant 0 : index
    %0 = vector.load %arg0[%c0, %c0_0] : memref<16x33xf32, #tpu.memory_space<vmem>>, vector<16x33xf32>
    %1 = vector.shape_cast %0 : vector<16x33xf32> to vector<1x16x33xf32>
    %2 = vector.shape_cast %1 : vector<1x16x33xf32> to vector<1x16x33xf32>
    %3 = vector.broadcast %2 : vector<1x16x33xf32> to vector<4x16x33xf32>
    %c0_1 = arith.constant 0 : index
    %c0_2 = arith.constant 0 : index
    %c0_3 = arith.constant 0 : index
    %4 = vector.load %arg1[%c0_1, %c0_2, %c0_3] : memref<4x33x24xf32, #tpu.memory_space<vmem>>, vector<4x33x24xf32>
    "tpu.trace_start"() <{level = 10 : i32, message = "hne,hef->hnf"}> : () -> ()
    %cst = arith.constant dense<0.000000e+00> : vector<4x16x24xf32>
    %5 = tpu.matmul %3, %4, %cst {dimension_numbers = #tpu.dot_dimension_numbers<[2], [1], [1], [2], [0, 0, 0, 1, 1, 2], [0], [0]>} : vector<4x16x33xf32>, vector<4x33x24xf32>, vector<4x16x24xf32> -> vector<4x16x24xf32>
    "tpu.trace_stop"() : () -> ()
    %6 = vector.extract_strided_slice %5 {offsets = [0, 0, 0], sizes = [4, 16, 8], strides = [1, 1, 1]} : vector<4x16x24xf32> to vector<4x16x8xf32>
    %7 = vector.shape_cast %6 : vector<4x16x8xf32> to vector<8x8x8xf32>
    %8 = vector.extract_strided_slice %5 {offsets = [0, 0, 8], sizes = [4, 16, 8], strides = [1, 1, 1]} : vector<4x16x24xf32> to vector<4x16x8xf32>
    %9 = vector.shape_cast %8 : vector<4x16x8xf32> to vector<8x8x8xf32>
    %10 = vector.extract_strided_slice %5 {offsets = [0, 0, 16], sizes = [4, 16, 8], strides = [1, 1, 1]} : vector<4x16x24xf32> to vector<4x16x8xf32>
    %11 = vector.shape_cast %10 : vector<4x16x8xf32> to vector<8x8x8xf32>
    "tpu.trace_start"() <{level = 10 : i32, message = "nqd,nkd->nqk"}> : () -> ()
    %cst_4 = arith.constant dense<0.000000e+00> : vector<8x8x8xf32>
    %12 = tpu.matmul %7, %9, %cst_4 {dimension_numbers = #tpu.dot_dimension_numbers<[2], [2], [1], [1], [0, 0, 0, 1, 1, 1], [0], [0]>} : vector<8x8x8xf32>, vector<8x8x8xf32>, vector<8x8x8xf32> -> vector<8x8x8xf32>
    "tpu.trace_stop"() : () -> ()
    %cst_5 = arith.constant dense<0xFF800000> : vector<8x8xf32>
    %13 = vector.multi_reduction <maximumf>, %12, %cst_5 [2] : vector<8x8x8xf32> to vector<8x8xf32>
    %14 = vector.shape_cast %13 : vector<8x8xf32> to vector<8x8x1xf32>
    %15 = vector.broadcast %14 : vector<8x8x1xf32> to vector<8x8x8xf32>
    %16 = arith.subf %12, %15 : vector<8x8x8xf32>
    %17 = math.exp %16 : vector<8x8x8xf32>
    %cst_6 = arith.constant dense<0.000000e+00> : vector<8x8xf32>
    %18 = vector.multi_reduction <add>, %17, %cst_6 [2] : vector<8x8x8xf32> to vector<8x8xf32>
    %19 = vector.shape_cast %18 : vector<8x8xf32> to vector<8x8x1xf32>
    %20 = tpu.reciprocal %19 {approx = true} : vector<8x8x1xf32> -> vector<8x8x1xf32>
    %21 = arith.mulf %19, %20 : vector<8x8x1xf32>
    %cst_7 = arith.constant 2.000000e+00 : f32
    %22 = vector.broadcast %cst_7 : f32 to vector<8x8x1xf32>
    %23 = arith.subf %22, %21 : vector<8x8x1xf32>
    %24 = arith.mulf %20, %23 : vector<8x8x1xf32>
    %25 = vector.broadcast %24 : vector<8x8x1xf32> to vector<8x8x8xf32>
    %26 = arith.mulf %17, %25 : vector<8x8x8xf32>
    "tpu.trace_start"() <{level = 10 : i32, message = "nqk,nkd->nqd"}> : () -> ()
    %cst_8 = arith.constant dense<0.000000e+00> : vector<8x8x8xf32>
    %27 = tpu.matmul %26, %11, %cst_8 {dimension_numbers = #tpu.dot_dimension_numbers<[2], [1], [1], [2], [0, 0, 0, 1, 1, 2], [0], [0]>} : vector<8x8x8xf32>, vector<8x8x8xf32>, vector<8x8x8xf32> -> vector<8x8x8xf32>
    "tpu.trace_stop"() : () -> ()
    %28 = vector.shape_cast %27 : vector<8x8x8xf32> to vector<4x16x8xf32>
    %c0_9 = arith.constant 0 : index
    %c0_10 = arith.constant 0 : index
    %29 = vector.load %arg2[%c0_9, %c0_10] : memref<33x128xf32, #tpu.memory_space<vmem>>, vector<32x128xf32>
    %30 = vector.shape_cast %29 : vector<32x128xf32> to vector<4x8x128xf32>
    %c32 = arith.constant 32 : index
    %c0_11 = arith.constant 0 : index
    %31 = vector.load %arg2[%c32, %c0_11] : memref<33x128xf32, #tpu.memory_space<vmem>>, vector<1x128xf32>
    "tpu.trace_start"() <{level = 10 : i32, message = "hnd,hdf->hnf"}> : () -> ()
    %cst_12 = arith.constant dense<0.000000e+00> : vector<4x16x128xf32>
    %32 = tpu.matmul %28, %30, %cst_12 {dimension_numbers = #tpu.dot_dimension_numbers<[2], [1], [1], [2], [0, 0, 0, 1, 1, 2], [0], [0]>} : vector<4x16x8xf32>, vector<4x8x128xf32>, vector<4x16x128xf32> -> vector<4x16x128xf32>
    "tpu.trace_stop"() : () -> ()
    %33 = vector.extract_strided_slice %32 {offsets = [0, 0, 0], sizes = [1, 16, 128], strides = [1, 1, 1]} : vector<4x16x128xf32> to vector<1x16x128xf32>
    %34 = vector.shape_cast %33 : vector<1x16x128xf32> to vector<16x128xf32>
    %35 = vector.extract_strided_slice %32 {offsets = [1, 0, 0], sizes = [1, 16, 128], strides = [1, 1, 1]} : vector<4x16x128xf32> to vector<1x16x128xf32>
    %36 = vector.shape_cast %35 : vector<1x16x128xf32> to vector<16x128xf32>
    %37 = arith.addf %34, %36 : vector<16x128xf32>
    %38 = vector.extract_strided_slice %32 {offsets = [2, 0, 0], sizes = [1, 16, 128], strides = [1, 1, 1]} : vector<4x16x128xf32> to vector<1x16x128xf32>
    %39 = vector.shape_cast %38 : vector<1x16x128xf32> to vector<16x128xf32>
    %40 = arith.addf %37, %39 : vector<16x128xf32>
    %41 = vector.extract_strided_slice %32 {offsets = [3, 0, 0], sizes = [1, 16, 128], strides = [1, 1, 1]} : vector<4x16x128xf32> to vector<1x16x128xf32>
    %42 = vector.shape_cast %41 : vector<1x16x128xf32> to vector<16x128xf32>
    %43 = arith.addf %40, %42 : vector<16x128xf32>
    %44 = vector.broadcast %31 : vector<1x128xf32> to vector<16x128xf32>
    %45 = arith.addf %43, %44 : vector<16x128xf32>
    %c0_13 = arith.constant 0 : index
    %c0_14 = arith.constant 0 : index
    %46 = vector.load %arg3[%c0_13, %c0_14] : memref<16x128xf32, #tpu.memory_space<vmem>>, vector<16x128xf32>
    tpu.vector_store %arg3[%c0_13, %c0_14], %45 {strides = array<i32>} : memref<16x128xf32, #tpu.memory_space<vmem>>, vector<16x128xf32>,
    return
  }
}

</mosaic_0001>

<llo_original>
// kernel: tpu_custom_call.1
$region0: #{tpu_custom_call.1}
  #allocation0 [shape = 'u32[]', space=smem, size = 0x4, offset = 0x4, fixed_abs, tag = 'smem constant byte address 0x4 - core index']
  #allocation1 [shape = 'u32[144,128]{1,0:T(1,128)}', space=vmem, size = 0x12000, scoped, tag = 'internal scratch']
  %s0 = inlined_call_operand.vmem [shape: f32[16,33], index: 0, kind: input, shape index: {}]
  %s1 = inlined_call_operand.vmem [shape: f32[4,33,24], index: 1, kind: input, shape index: {}]
  %s2 = inlined_call_operand.vmem [shape: f32[33,128], index: 2, kind: input, shape index: {}]
  %s3 = inlined_call_operand.hbm [shape: f32[16,128], index: 3, kind: output, shape index: {}]
  %s4 = sld [smem:[#allocation0]]
  $region22: #{tpu_custom_call.1} parent=0
    _
  %s6 = ssub.s32 1, %s4
  %s7 = scalar_select 0, %s6, %s4
  $region1: #{tpu_custom_call.1} parent=0
    #allocation2 [shape = 'u8[8192]{0}', space=vmem, size = 0x2000, scoped, tag = 'output window, operand 0, single buffered']
    #allocation3 [shape = 's32[1]{0}', space=sflag, size = 0x4, scoped, tag = 'scoped memory for tpu_custom_call.1']
    %8 = vsyncpa [#allocation3], 0
    // Predicated region
    $region2: #{tpu_custom_call.1} parent=1 // pred_check
      _
    $region3: #{tpu_custom_call.1} parent=1 // pred_check_branch
      %10 = sbr.rel (0) target = $region5
    $region4: #{tpu_custom_call.1} parent=1 // pred_region
      _
    $region5: #{tpu_custom_call.1} parent=1 // pred_fallthru
      _
    // Predicated region
    $region6: #{tpu_custom_call.1} parent=1 // pred_check
      _
    $region7: #{tpu_custom_call.1} parent=1 // pred_check_branch
      %12 = sbr.rel (0) target = $region9
    $region8: #{tpu_custom_call.1} parent=1 // pred_region
      _
    $region9: #{tpu_custom_call.1} parent=1 // pred_fallthru
      _
    // Predicated region
    $region10: #{tpu_custom_call.1} parent=1 // pred_check
      _
    $region11: #{tpu_custom_call.1} parent=1 // pred_check_branch
      %14 = sbr.rel (0) target = $region13
    $region12: #{tpu_custom_call.1} parent=1 // pred_region
      _
    $region13: #{tpu_custom_call.1} parent=1 // pred_fallthru
      _
    %v15 = vld [vmem:[%s0] sm:$0xff]
    %v16 = vld [vmem:[%s0 + $0x8] sm:$0xff]
    %v17 = vld [vmem:[%s1] sm:$0xff]
    %v18 = vld [vmem:[%s1 + $0x8] sm:$0xff]
    %v19 = vld [vmem:[%s1 + $0x10] sm:$0xff]
    %v20 = vld [vmem:[%s1 + $0x18] sm:$0xff]
    %v21 = vld [vmem:[%s1 + $0x20] sm:$0x1]
    %v22 = vld [vmem:[%s1 + $0x28] sm:$0xff]
    %v23 = vld [vmem:[%s1 + $0x30] sm:$0xff]
    %v24 = vld [vmem:[%s1 + $0x38] sm:$0xff]
    %v25 = vld [vmem:[%s1 + $0x40] sm:$0xff]
    %v26 = vld [vmem:[%s1 + $0x48] sm:$0x1]
    %v27 = vld [vmem:[%s1 + $0x50] sm:$0xff]
    %v28 = vld [vmem:[%s1 + $0x58] sm:$0xff]
    %v29 = vld [vmem:[%s1 + $0x60] sm:$0xff]
    %v30 = vld [vmem:[%s1 + $0x68] sm:$0xff]
    %v31 = vld [vmem:[%s1 + $0x70] sm:$0x1]
    %v32 = vld [vmem:[%s1 + $0x78] sm:$0xff]
    %v33 = vld [vmem:[%s1 + $0x80] sm:$0xff]
    %v34 = vld [vmem:[%s1 + $0x88] sm:$0xff]
    %v35 = vld [vmem:[%s1 + $0x90] sm:$0xff]
    %v36 = vld [vmem:[%s1 + $0x98] sm:$0x1]
    %vm37 = vcmask 269312
    %v39 = vsel %vm37, %v15, 0
    %v42 = vsel %vm37, %v16, 0
    %vm44 = vcmask 1040384
    %v46 = vsel %vm44, %v21, 0
    %48 = vmatprep.subr.mxu0 0.0
    %49 = vmatpush1.msra.mxu0 %v17
    %50 = vmatprep.subr.mxu0 0.0
    %51 = vmatpush1.msra.mxu0 %v18
    %52 = vmatprep.subr.mxu0 0.0
    %53 = vmatpush1.msra.mxu0 %v19
    %54 = vmatprep.subr.mxu0 0.0
    %55 = vmatpush1.msra.mxu0 %v20
    %56 = vmatprep.subr.mxu0 0.0
    %57 = vmatpush1.msra.mxu0 %v46
    %58 = vmatprep.subr.mxu0 0.0
    %59 = vmatpush1.msra.mxu0 0.0
    %60 = vmatprep.subr.mxu0 0.0
    %61 = vmatpush1.msra.mxu0 0.0
    %62 = vmatprep.subr.mxu0 0.0
    %63 = vmatpush1.msra.mxu0 0.0
    %64 = vmatprep.subr.mxu0 0.0
    %65 = vmatpush1.msra.mxu0 0.0
    %66 = vmatprep.subr.mxu0 0.0
    %67 = vmatpush1.msra.mxu0 0.0
    %68 = vmatprep.subr.mxu0 0.0
    %69 = vmatpush1.msra.mxu0 0.0
    %70 = vmatprep.subr.mxu0 0.0
    %71 = vmatpush1.msra.mxu0 0.0
    %72 = vmatprep.subr.mxu0 0.0
    %73 = vmatpush1.msra.mxu0 0.0
    %74 = vmatprep.subr.mxu0 0.0
    %75 = vmatpush1.msra.mxu0 0.0
    %76 = vmatprep.subr.mxu0 0.0
    %77 = vmatpush1.msra.mxu0 0.0
    %78 = vmatprep.subr.mxu0 0.0
    %79 = vmatpush1.msra.mxu0 0.0
    %80 = vmatprep.subr.mxu0 0.0
    %81 = vmatpush1.msra.mxu0 0.0
    %82 = vmatprep.subr.mxu0 0.0
    %83 = vmatpush1.msra.mxu0 0.0
    %84 = vmatprep.subr.mxu0 0.0
    %85 = vmatpush1.msra.mxu0 0.0
    %86 = vmatprep.subr.mxu0 0.0
    %87 = vmatpush1.msra.mxu0 0.0
    %88 = vmatprep.subr.mxu0 0.0
    %89 = vmatpush1.msra.mxu0 0.0
    %90 = vmatprep.subr.mxu0 0.0
    %91 = vmatpush1.msra.mxu0 0.0
    %92 = vmatprep.subr.mxu0 0.0
    %93 = vmatpush1.msra.mxu0 0.0
    %94 = vmatprep.subr.mxu0 0.0
    %95 = vmatpush1.msra.mxu0 0.0
    %96 = vmatprep.subr.mxu0 0.0
    %97 = vmatpush1.msra.mxu0 0.0
    %98 = vmatprep.subr.mxu0 0.0
    %99 = vmatpush1.msra.mxu0 0.0
    %100 = vmatprep.subr.mxu0 0.0
    %101 = vmatpush1.msra.mxu0 0.0
    %102 = vmatprep.subr.mxu0 0.0
    %103 = vmatpush1.msra.mxu0 0.0
    %104 = vmatprep.subr.mxu0 0.0
    %105 = vmatpush1.msra.mxu0 0.0
    %106 = vmatprep.subr.mxu0 0.0
    %107 = vmatpush1.msra.mxu0 0.0
    %108 = vmatprep.subr.mxu0 0.0
    %109 = vmatpush1.msra.mxu0 0.0
    %110 = vmatprep.subr.mxu0 0.0
    %111 = vmatpush1.msra.mxu0 0.0
    %112 = vmatprep.mubr.f32.mxu0 0.0
    %113 = vmatmul.mubr.f32.gmra.mrb[0].mxu0 %v39
    %v114 = vpop.f32.mrb[0].mxu0
    %v115 = vadd.f32 0.0, %v114
    %v116 = vpop.f32.mrb[0].mxu0
    %117 = vmatprep.mubr.f32.mxu0 0.0
    %118 = vmatmul.mubr.f32.gmra.mrb[0].mxu0 %v42
    %v119 = vpop.f32.mrb[0].mxu0
    %v120 = vadd.f32 0.0, %v119
    %v121 = vpop.f32.mrb[0].mxu0
    %122 = vdwg.mxu0
    %v124 = vsel %vm44, %v26, 0
    %126 = vmatprep.subr.mxu0 0.0
    %127 = vmatpush1.msra.mxu0 %v22
    %128 = vmatprep.subr.mxu0 0.0
    %129 = vmatpush1.msra.mxu0 %v23
    %130 = vmatprep.subr.mxu0 0.0
    %131 = vmatpush1.msra.mxu0 %v24
    %132 = vmatprep.subr.mxu0 0.0
    %133 = vmatpush1.msra.mxu0 %v25
    %134 = vmatprep.subr.mxu0 0.0
    %135 = vmatpush1.msra.mxu0 %v124
    %136 = vmatprep.subr.mxu0 0.0
    %137 = vmatpush1.msra.mxu0 0.0
    %138 = vmatprep.subr.mxu0 0.0
    %139 = vmatpush1.msra.mxu0 0.0
    %140 = vmatprep.subr.mxu0 0.0
    %141 = vmatpush1.msra.mxu0 0.0
    %142 = vmatprep.subr.mxu0 0.0
    %143 = vmatpush1.msra.mxu0 0.0
    %144 = vmatprep.subr.mxu0 0.0
    %145 = vmatpush1.msra.mxu0 0.0
    %146 = vmatprep.subr.mxu0 0.0
    %147 = vmatpush1.msra.mxu0 0.0
    %148 = vmatprep.subr.mxu0 0.0
    %149 = vmatpush1.msra.mxu0 0.0
    %150 = vmatprep.subr.mxu0 0.0
    %151 = vmatpush1.msra.mxu0 0.0
    %152 = vmatprep.subr.mxu0 0.0
    %153 = vmatpush1.msra.mxu0 0.0
    %154 = vmatprep.subr.mxu0 0.0
    %155 = vmatpush1.msra.mxu0 0.0
    %156 = vmatprep.subr.mxu0 0.0
    %157 = vmatpush1.msra.mxu0 0.0
    %158 = vmatprep.subr.mxu0 0.0
    %159 = vmatpush1.msra.mxu0 0.0
    %160 = vmatprep.subr.mxu0 0.0
    %161 = vmatpush1.msra.mxu0 0.0
    %162 = vmatprep.subr.mxu0 0.0
    %163 = vmatpush1.msra.mxu0 0.0
    %164 = vmatprep.subr.mxu0 0.0
    %165 = vmatpush1.msra.mxu0 0.0
    %166 = vmatprep.subr.mxu0 0.0
    %167 = vmatpush1.msra.mxu0 0.0
    %168 = vmatprep.subr.mxu0 0.0
    %169 = vmatpush1.msra.mxu0 0.0
    %170 = vmatprep.subr.mxu0 0.0
    %171 = vmatpush1.msra.mxu0 0.0
    %172 = vmatprep.subr.mxu0 0.0
    %173 = vmatpush1.msra.mxu0 0.0
    %174 = vmatprep.subr.mxu0 0.0
    %175 = vmatpush1.msra.mxu0 0.0
    %176 = vmatprep.subr.mxu0 0.0
    %177 = vmatpush1.msra.mxu0 0.0
    %178 = vmatprep.subr.mxu0 0.0
    %179 = vmatpush1.msra.mxu0 0.0
    %180 = vmatprep.subr.mxu0 0.0
    %181 = vmatpush1.msra.mxu0 0.0
    %182 = vmatprep.subr.mxu0 0.0
    %183 = vmatpush1.msra.mxu0 0.0
    %184 = vmatprep.subr.mxu0 0.0
    %185 = vmatpush1.msra.mxu0 0.0
    %186 = vmatprep.subr.mxu0 0.0
    %187 = vmatpush1.msra.mxu0 0.0
    %188 = vmatprep.subr.mxu0 0.0
    %189 = vmatpush1.msra.mxu0 0.0
    %190 = vmatprep.mubr.f32.mxu0 0.0
    %191 = vmatmul.mubr.f32.gmra.mrb[0].mxu0 %v39
    %v192 = vpop.f32.mrb[0].mxu0
    %v193 = vadd.f32 0.0, %v192
    %v194 = vpop.f32.mrb[0].mxu0
    %195 = vmatprep.mubr.f32.mxu0 0.0
    %196 = vmatmul.mubr.f32.gmra.mrb[0].mxu0 %v42
    %v197 = vpop.f32.mrb[0].mxu0
    %v198 = vadd.f32 0.0, %v197
    %v199 = vpop.f32.mrb[0].mxu0
    %200 = vdwg.mxu0
    %v202 = vsel %vm44, %v31, 0
    %204 = vmatprep.subr.mxu0 0.0
    %205 = vmatpush1.msra.mxu0 %v27
    %206 = vmatprep.subr.mxu0 0.0
    %207 = vmatpush1.msra.mxu0 %v28
    %208 = vmatprep.subr.mxu0 0.0
    %209 = vmatpush1.msra.mxu0 %v29
    %210 = vmatprep.subr.mxu0 0.0
    %211 = vmatpush1.msra.mxu0 %v30
    %212 = vmatprep.subr.mxu0 0.0
    %213 = vmatpush1.msra.mxu0 %v202
    %214 = vmatprep.subr.mxu0 0.0
    %215 = vmatpush1.msra.mxu0 0.0
    %216 = vmatprep.subr.mxu0 0.0
    %217 = vmatpush1.msra.mxu0 0.0
    %218 = vmatprep.subr.mxu0 0.0
    %219 = vmatpush1.msra.mxu0 0.0
    %220 = vmatprep.subr.mxu0 0.0
    %221 = vmatpush1.msra.mxu0 0.0
    %222 = vmatprep.subr.mxu0 0.0
    %223 = vmatpush1.msra.mxu0 0.0
    %224 = vmatprep.subr.mxu0 0.0
    %225 = vmatpush1.msra.mxu0 0.0
    %226 = vmatprep.subr.mxu0 0.0
    %227 = vmatpush1.msra.mxu0 0.0
    %228 = vmatprep.subr.mxu0 0.0
    %229 = vmatpush1.msra.mxu0 0.0
    %230 = vmatprep.subr.mxu0 0.0
    %231 = vmatpush1.msra.mxu0 0.0
    %232 = vmatprep.subr.mxu0 0.0
    %233 = vmatpush1.msra.mxu0 0.0
    %234 = vmatprep.subr.mxu0 0.0
    %235 = vmatpush1.msra.mxu0 0.0
    %236 = vmatprep.subr.mxu0 0.0
    %237 = vmatpush1.msra.mxu0 0.0
    %238 = vmatprep.subr.mxu0 0.0
    %239 = vmatpush1.msra.mxu0 0.0
    %240 = vmatprep.subr.mxu0 0.0
    %241 = vmatpush1.msra.mxu0 0.0
    %242 = vmatprep.subr.mxu0 0.0
    %243 = vmatpush1.msra.mxu0 0.0
    %244 = vmatprep.subr.mxu0 0.0
    %245 = vmatpush1.msra.mxu0 0.0
    %246 = vmatprep.subr.mxu0 0.0
    %247 = vmatpush1.msra.mxu0 0.0
    %248 = vmatprep.subr.mxu0 0.0
    %249 = vmatpush1.msra.mxu0 0.0
    %250 = vmatprep.subr.mxu0 0.0
    %251 = vmatpush1.msra.mxu0 0.0
    %252 = vmatprep.subr.mxu0 0.0
    %253 = vmatpush1.msra.mxu0 0.0
    %254 = vmatprep.subr.mxu0 0.0
    %255 = vmatpush1.msra.mxu0 0.0
    %256 = vmatprep.subr.mxu0 0.0
    %257 = vmatpush1.msra.mxu0 0.0
    %258 = vmatprep.subr.mxu0 0.0
    %259 = vmatpush1.msra.mxu0 0.0
    %260 = vmatprep.subr.mxu0 0.0
    %261 = vmatpush1.msra.mxu0 0.0
    %262 = vmatprep.subr.mxu0 0.0
    %263 = vmatpush1.msra.mxu0 0.0
    %264 = vmatprep.subr.mxu0 0.0
    %265 = vmatpush1.msra.mxu0 0.0
    %266 = vmatprep.subr.mxu0 0.0
    %267 = vmatpush1.msra.mxu0 0.0
    %268 = vmatprep.mubr.f32.mxu0 0.0
    %269 = vmatmul.mubr.f32.gmra.mrb[0].mxu0 %v39
    %v270 = vpop.f32.mrb[0].mxu0
    %v271 = vadd.f32 0.0, %v270
    %v272 = vpop.f32.mrb[0].mxu0
    %273 = vmatprep.mubr.f32.mxu0 0.0
    %274 = vmatmul.mubr.f32.gmra.mrb[0].mxu0 %v42
    %v275 = vpop.f32.mrb[0].mxu0
    %v276 = vadd.f32 0.0, %v275
    %v277 = vpop.f32.mrb[0].mxu0
    %278 = vdwg.mxu0
    %v280 = vsel %vm44, %v36, 0
    %282 = vmatprep.subr.mxu0 0.0
    %283 = vmatpush1.msra.mxu0 %v32
    %284 = vmatprep.subr.mxu0 0.0
    %285 = vmatpush1.msra.mxu0 %v33
    %286 = vmatprep.subr.mxu0 0.0
    %287 = vmatpush1.msra.mxu0 %v34
    %288 = vmatprep.subr.mxu0 0.0
    %289 = vmatpush1.msra.mxu0 %v35
    %290 = vmatprep.subr.mxu0 0.0
    %291 = vmatpush1.msra.mxu0 %v280
    %292 = vmatprep.subr.mxu0 0.0
    %293 = vmatpush1.msra.mxu0 0.0
    %294 = vmatprep.subr.mxu0 0.0
    %295 = vmatpush1.msra.mxu0 0.0
    %296 = vmatprep.subr.mxu0 0.0
    %297 = vmatpush1.msra.mxu0 0.0
    %298 = vmatprep.subr.mxu0 0.0
    %299 = vmatpush1.msra.mxu0 0.0
    %300 = vmatprep.subr.mxu0 0.0
    %301 = vmatpush1.msra.mxu0 0.0
    %302 = vmatprep.subr.mxu0 0.0
    %303 = vmatpush1.msra.mxu0 0.0
    %304 = vmatprep.subr.mxu0 0.0
    %305 = vmatpush1.msra.mxu0 0.0
    %306 = vmatprep.subr.mxu0 0.0
    %307 = vmatpush1.msra.mxu0 0.0
    %308 = vmatprep.subr.mxu0 0.0
    %309 = vmatpush1.msra.mxu0 0.0
    %310 = vmatprep.subr.mxu0 0.0
    %311 = vmatpush1.msra.mxu0 0.0
    %312 = vmatprep.subr.mxu0 0.0
    %313 = vmatpush1.msra.mxu0 0.0
    %314 = vmatprep.subr.mxu0 0.0
    %315 = vmatpush1.msra.mxu0 0.0
    %316 = vmatprep.subr.mxu0 0.0
    %317 = vmatpush1.msra.mxu0 0.0
    %318 = vmatprep.subr.mxu0 0.0
    %319 = vmatpush1.msra.mxu0 0.0
    %320 = vmatprep.subr.mxu0 0.0
    %321 = vmatpush1.msra.mxu0 0.0
    %322 = vmatprep.subr.mxu0 0.0
    %323 = vmatpush1.msra.mxu0 0.0
    %324 = vmatprep.subr.mxu0 0.0
    %325 = vmatpush1.msra.mxu0 0.0
    %326 = vmatprep.subr.mxu0 0.0
    %327 = vmatpush1.msra.mxu0 0.0
    %328 = vmatprep.subr.mxu0 0.0
    %329 = vmatpush1.msra.mxu0 0.0
    %330 = vmatprep.subr.mxu0 0.0
    %331 = vmatpush1.msra.mxu0 0.0
    %332 = vmatprep.subr.mxu0 0.0
    %333 = vmatpush1.msra.mxu0 0.0
    %334 = vmatprep.subr.mxu0 0.0
    %335 = vmatpush1.msra.mxu0 0.0
    %336 = vmatprep.subr.mxu0 0.0
    %337 = vmatpush1.msra.mxu0 0.0
    %338 = vmatprep.subr.mxu0 0.0
    %339 = vmatpush1.msra.mxu0 0.0
    %340 = vmatprep.subr.mxu0 0.0
    %341 = vmatpush1.msra.mxu0 0.0
    %342 = vmatprep.subr.mxu0 0.0
    %343 = vmatpush1.msra.mxu0 0.0
    %344 = vmatprep.subr.mxu0 0.0
    %345 = vmatpush1.msra.mxu0 0.0
    %346 = vmatprep.mubr.f32.mxu0 0.0
    %347 = vmatmul.mubr.f32.gmra.mrb[0].mxu0 %v39
    %v348 = vpop.f32.mrb[0].mxu0
    %v349 = vadd.f32 0.0, %v348
    %v350 = vpop.f32.mrb[0].mxu0
    %351 = vmatprep.mubr.f32.mxu0 0.0
    %352 = vmatmul.mubr.f32.gmra.mrb[0].mxu0 %v42
    %v353 = vpop.f32.mrb[0].mxu0
    %v354 = vadd.f32 0.0, %v353
    %v355 = vpop.f32.mrb[0].mxu0
    %356 = vdwg.mxu0
    %358 = vrot.lane.b32.xlu0 %v115, 120
    %v359 = vpop.permute.xlu0 %358
    %vm360 = vcmask 64512
    %v361 = vsel %vm360, %v115, 0
    %v363 = vsel %vm360, %v359, 0
    %365 = vmatprep.subr.mxu0 0.0
    %366 = vmatpush1.xpose.msra.mxu0 %v363
    %367 = vmatprep.subr.mxu0 0.0
    %368 = vmatpush1.xpose.msra.mxu0 0.0
    %369 = vmatprep.subr.mxu0 0.0
    %370 = vmatpush1.xpose.msra.mxu0 0.0
    %371 = vmatprep.subr.mxu0 0.0
    %372 = vmatpush1.xpose.msra.mxu0 0.0
    %373 = vmatprep.subr.mxu0 0.0
    %374 = vmatpush1.xpose.msra.mxu0 0.0
    %375 = vmatprep.subr.mxu0 0.0
    %376 = vmatpush1.xpose.msra.mxu0 0.0
    %377 = vmatprep.subr.mxu0 0.0
    %378 = vmatpush1.xpose.msra.mxu0 0.0
    %379 = vmatprep.subr.mxu0 0.0
    %380 = vmatpush1.xpose.msra.mxu0 0.0
    %381 = vmatprep.subr.mxu0 0.0
    %382 = vmatpush1.xpose.msra.mxu0 0.0
    %383 = vmatprep.subr.mxu0 0.0
    %384 = vmatpush1.xpose.msra.mxu0 0.0
    %385 = vmatprep.subr.mxu0 0.0
    %386 = vmatpush1.xpose.msra.mxu0 0.0
    %387 = vmatprep.subr.mxu0 0.0
    %388 = vmatpush1.xpose.msra.mxu0 0.0
    %389 = vmatprep.subr.mxu0 0.0
    %390 = vmatpush1.xpose.msra.mxu0 0.0
    %391 = vmatprep.subr.mxu0 0.0
    %392 = vmatpush1.xpose.msra.mxu0 0.0
    %393 = vmatprep.subr.mxu0 0.0
    %394 = vmatpush1.xpose.msra.mxu0 0.0
    %395 = vmatprep.subr.mxu0 0.0
    %396 = vmatpush1.xpose.msra.mxu0 0.0
    %397 = vmatprep.subr.mxu0 0.0
    %398 = vmatpush1.xpose.msra.mxu0 0.0
    %399 = vmatprep.subr.mxu0 0.0
    %400 = vmatpush1.xpose.msra.mxu0 0.0
    %401 = vmatprep.subr.mxu0 0.0
    %402 = vmatpush1.xpose.msra.mxu0 0.0
    %403 = vmatprep.subr.mxu0 0.0
    %404 = vmatpush1.xpose.msra.mxu0 0.0
    %405 = vmatprep.subr.mxu0 0.0
    %406 = vmatpush1.xpose.msra.mxu0 0.0
    %407 = vmatprep.subr.mxu0 0.0
    %408 = vmatpush1.xpose.msra.mxu0 0.0
    %409 = vmatprep.subr.mxu0 0.0
    %410 = vmatpush1.xpose.msra.mxu0 0.0
    %411 = vmatprep.subr.mxu0 0.0
    %412 = vmatpush1.xpose.msra.mxu0 0.0
    %413 = vmatprep.subr.mxu0 0.0
    %414 = vmatpush1.xpose.msra.mxu0 0.0
    %415 = vmatprep.subr.mxu0 0.0
    %416 = vmatpush1.xpose.msra.mxu0 0.0
    %417 = vmatprep.subr.mxu0 0.0
    %418 = vmatpush1.xpose.msra.mxu0 0.0
    %419 = vmatprep.subr.mxu0 0.0
    %420 = vmatpush1.xpose.msra.mxu0 0.0
    %421 = vmatprep.subr.mxu0 0.0
    %422 = vmatpush1.xpose.msra.mxu0 0.0
    %423 = vmatprep.subr.mxu0 0.0
    %424 = vmatpush1.xpose.msra.mxu0 0.0
    %425 = vmatprep.subr.mxu0 0.0
    %426 = vmatpush1.xpose.msra.mxu0 0.0
    %427 = vmatprep.subr.mxu0 0.0
    %428 = vmatpush1.xpose.msra.mxu0 0.0
    %429 = vmatprep.mubr.f32.mxu0 0.0
    %430 = vmatmul.mubr.f32.gmra.mrb[0].mxu0 %v361
    %v431 = vpop.f32.mrb[0].mxu0
    %v432 = vadd.f32 0.0, %v431
    %v433 = vpop.f32.mrb[0].mxu0
    %434 = vdwg.mxu0
    %436 = vrot.lane.b32.xlu0 %v120, 120
    %v437 = vpop.permute.xlu0 %436
    %v438 = vsel %vm360, %v120, 0
    %v440 = vsel %vm360, %v437, 0
    %442 = vmatprep.subr.mxu0 0.0
    %443 = vmatpush1.xpose.msra.mxu0 %v440
    %444 = vmatprep.subr.mxu0 0.0
    %445 = vmatpush1.xpose.msra.mxu0 0.0
    %446 = vmatprep.subr.mxu0 0.0
    %447 = vmatpush1.xpose.msra.mxu0 0.0
    %448 = vmatprep.subr.mxu0 0.0
    %449 = vmatpush1.xpose.msra.mxu0 0.0
    %450 = vmatprep.subr.mxu0 0.0
    %451 = vmatpush1.xpose.msra.mxu0 0.0
    %452 = vmatprep.subr.mxu0 0.0
    %453 = vmatpush1.xpose.msra.mxu0 0.0
    %454 = vmatprep.subr.mxu0 0.0
    %455 = vmatpush1.xpose.msra.mxu0 0.0
    %456 = vmatprep.subr.mxu0 0.0
    %457 = vmatpush1.xpose.msra.mxu0 0.0
    %458 = vmatprep.subr.mxu0 0.0
    %459 = vmatpush1.xpose.msra.mxu0 0.0
    %460 = vmatprep.subr.mxu0 0.0
    %461 = vmatpush1.xpose.msra.mxu0 0.0
    %462 = vmatprep.subr.mxu0 0.0
    %463 = vmatpush1.xpose.msra.mxu0 0.0
    %464 = vmatprep.subr.mxu0 0.0
    %465 = vmatpush1.xpose.msra.mxu0 0.0
    %466 = vmatprep.subr.mxu0 0.0
    %467 = vmatpush1.xpose.msra.mxu0 0.0
    %468 = vmatprep.subr.mxu0 0.0
    %469 = vmatpush1.xpose.msra.mxu0 0.0
    %470 = vmatprep.subr.mxu0 0.0
    %471 = vmatpush1.xpose.msra.mxu0 0.0
    %472 = vmatprep.subr.mxu0 0.0
    %473 = vmatpush1.xpose.msra.mxu0 0.0
    %474 = vmatprep.subr.mxu0 0.0
    %475 = vmatpush1.xpose.msra.mxu0 0.0
    %476 = vmatprep.subr.mxu0 0.0
    %477 = vmatpush1.xpose.msra.mxu0 0.0
    %478 = vmatprep.subr.mxu0 0.0
    %479 = vmatpush1.xpose.msra.mxu0 0.0
    %480 = vmatprep.subr.mxu0 0.0
    %481 = vmatpush1.xpose.msra.mxu0 0.0
    %482 = vmatprep.subr.mxu0 0.0
    %483 = vmatpush1.xpose.msra.mxu0 0.0
    %484 = vmatprep.subr.mxu0 0.0
    %485 = vmatpush1.xpose.msra.mxu0 0.0
    %486 = vmatprep.subr.mxu0 0.0
    %487 = vmatpush1.xpose.msra.mxu0 0.0
    %488 = vmatprep.subr.mxu0 0.0
    %489 = vmatpush1.xpose.msra.mxu0 0.0
    %490 = vmatprep.subr.mxu0 0.0
    %491 = vmatpush1.xpose.msra.mxu0 0.0
    %492 = vmatprep.subr.mxu0 0.0
    %493 = vmatpush1.xpose.msra.mxu0 0.0
    %494 = vmatprep.subr.mxu0 0.0
    %495 = vmatpush1.xpose.msra.mxu0 0.0
    %496 = vmatprep.subr.mxu0 0.0
    %497 = vmatpush1.xpose.msra.mxu0 0.0
    %498 = vmatprep.subr.mxu0 0.0
    %499 = vmatpush1.xpose.msra.mxu0 0.0
    %500 = vmatprep.subr.mxu0 0.0
    %501 = vmatpush1.xpose.msra.mxu0 0.0
    %502 = vmatprep.subr.mxu0 0.0
    %503 = vmatpush1.xpose.msra.mxu0 0.0
    %504 = vmatprep.subr.mxu0 0.0
    %505 = vmatpush1.xpose.msra.mxu0 0.0
    %506 = vmatprep.mubr.f32.mxu0 0.0
    %507 = vmatmul.mubr.f32.gmra.mrb[0].mxu0 %v438
    %v508 = vpop.f32.mrb[0].mxu0
    %v509 = vadd.f32 0.0, %v508
    %v510 = vpop.f32.mrb[0].mxu0
    %511 = vdwg.mxu0
    %513 = vrot.lane.b32.xlu0 %v193, 120
    %v514 = vpop.permute.xlu0 %513
    %v515 = vsel %vm360, %v193, 0
    %v517 = vsel %vm360, %v514, 0
    %519 = vmatprep.subr.mxu0 0.0
    %520 = vmatpush1.xpose.msra.mxu0 %v517
    %521 = vmatprep.subr.mxu0 0.0
    %522 = vmatpush1.xpose.msra.mxu0 0.0
    %523 = vmatprep.subr.mxu0 0.0
    %524 = vmatpush1.xpose.msra.mxu0 0.0
    %525 = vmatprep.subr.mxu0 0.0
    %526 = vmatpush1.xpose.msra.mxu0 0.0
    %527 = vmatprep.subr.mxu0 0.0
    %528 = vmatpush1.xpose.msra.mxu0 0.0
    %529 = vmatprep.subr.mxu0 0.0
    %530 = vmatpush1.xpose.msra.mxu0 0.0
    %531 = vmatprep.subr.mxu0 0.0
    %532 = vmatpush1.xpose.msra.mxu0 0.0
    %533 = vmatprep.subr.mxu0 0.0
    %534 = vmatpush1.xpose.msra.mxu0 0.0
    %535 = vmatprep.subr.mxu0 0.0
    %536 = vmatpush1.xpose.msra.mxu0 0.0
    %537 = vmatprep.subr.mxu0 0.0
    %538 = vmatpush1.xpose.msra.mxu0 0.0
    %539 = vmatprep.subr.mxu0 0.0
    %540 = vmatpush1.xpose.msra.mxu0 0.0
    %541 = vmatprep.subr.mxu0 0.0
    %542 = vmatpush1.xpose.msra.mxu0 0.0
    %543 = vmatprep.subr.mxu0 0.0
    %544 = vmatpush1.xpose.msra.mxu0 0.0
    %545 = vmatprep.subr.mxu0 0.0
    %546 = vmatpush1.xpose.msra.mxu0 0.0
    %547 = vmatprep.subr.mxu0 0.0
    %548 = vmatpush1.xpose.msra.mxu0 0.0
    %549 = vmatprep.subr.mxu0 0.0
    %550 = vmatpush1.xpose.msra.mxu0 0.0
    %551 = vmatprep.subr.mxu0 0.0
    %552 = vmatpush1.xpose.msra.mxu0 0.0
    %553 = vmatprep.subr.mxu0 0.0
    %554 = vmatpush1.xpose.msra.mxu0 0.0
    %555 = vmatprep.subr.mxu0 0.0
    %556 = vmatpush1.xpose.msra.mxu0 0.0
    %557 = vmatprep.subr.mxu0 0.0
    %558 = vmatpush1.xpose.msra.mxu0 0.0
    %559 = vmatprep.subr.mxu0 0.0
    %560 = vmatpush1.xpose.msra.mxu0 0.0
    %561 = vmatprep.subr.mxu0 0.0
    %562 = vmatpush1.xpose.msra.mxu0 0.0
    %563 = vmatprep.subr.mxu0 0.0
    %564 = vmatpush1.xpose.msra.mxu0 0.0
    %565 = vmatprep.subr.mxu0 0.0
    %566 = vmatpush1.xpose.msra.mxu0 0.0
    %567 = vmatprep.subr.mxu0 0.0
    %568 = vmatpush1.xpose.msra.mxu0 0.0
    %569 = vmatprep.subr.mxu0 0.0
    %570 = vmatpush1.xpose.msra.mxu0 0.0
    %571 = vmatprep.subr.mxu0 0.0
    %572 = vmatpush1.xpose.msra.mxu0 0.0
    %573 = vmatprep.subr.mxu0 0.0
    %574 = vmatpush1.xpose.msra.mxu0 0.0
    %575 = vmatprep.subr.mxu0 0.0
    %576 = vmatpush1.xpose.msra.mxu0 0.0
    %577 = vmatprep.subr.mxu0 0.0
    %578 = vmatpush1.xpose.msra.mxu0 0.0
    %579 = vmatprep.subr.mxu0 0.0
    %580 = vmatpush1.xpose.msra.mxu0 0.0
    %581 = vmatprep.subr.mxu0 0.0
    %582 = vmatpush1.xpose.msra.mxu0 0.0
    %583 = vmatprep.mubr.f32.mxu0 0.0
    %584 = vmatmul.mubr.f32.gmra.mrb[0].mxu0 %v515
    %v585 = vpop.f32.mrb[0].mxu0
    %v586 = vadd.f32 0.0, %v585
    %v587 = vpop.f32.mrb[0].mxu0
    %588 = vdwg.mxu0
    %590 = vrot.lane.b32.xlu0 %v198, 120
    %v591 = vpop.permute.xlu0 %590
    %v592 = vsel %vm360, %v198, 0
    %v594 = vsel %vm360, %v591, 0
    %596 = vmatprep.subr.mxu0 0.0
    %597 = vmatpush1.xpose.msra.mxu0 %v594
    %598 = vmatprep.subr.mxu0 0.0
    %599 = vmatpush1.xpose.msra.mxu0 0.0
    %600 = vmatprep.subr.mxu0 0.0
    %601 = vmatpush1.xpose.msra.mxu0 0.0
    %602 = vmatprep.subr.mxu0 0.0
    %603 = vmatpush1.xpose.msra.mxu0 0.0
    %604 = vmatprep.subr.mxu0 0.0
    %605 = vmatpush1.xpose.msra.mxu0 0.0
    %606 = vmatprep.subr.mxu0 0.0
    %607 = vmatpush1.xpose.msra.mxu0 0.0
    %608 = vmatprep.subr.mxu0 0.0
    %609 = vmatpush1.xpose.msra.mxu0 0.0
    %610 = vmatprep.subr.mxu0 0.0
    %611 = vmatpush1.xpose.msra.mxu0 0.0
    %612 = vmatprep.subr.mxu0 0.0
    %613 = vmatpush1.xpose.msra.mxu0 0.0
    %614 = vmatprep.subr.mxu0 0.0
    %615 = vmatpush1.xpose.msra.mxu0 0.0
    %616 = vmatprep.subr.mxu0 0.0
    %617 = vmatpush1.xpose.msra.mxu0 0.0
    %618 = vmatprep.subr.mxu0 0.0
    %619 = vmatpush1.xpose.msra.mxu0 0.0
    %620 = vmatprep.subr.mxu0 0.0
    %621 = vmatpush1.xpose.msra.mxu0 0.0
    %622 = vmatprep.subr.mxu0 0.0
    %623 = vmatpush1.xpose.msra.mxu0 0.0
    %624 = vmatprep.subr.mxu0 0.0
    %625 = vmatpush1.xpose.msra.mxu0 0.0
    %626 = vmatprep.subr.mxu0 0.0
    %627 = vmatpush1.xpose.msra.mxu0 0.0
    %628 = vmatprep.subr.mxu0 0.0
    %629 = vmatpush1.xpose.msra.mxu0 0.0
    %630 = vmatprep.subr.mxu0 0.0
    %631 = vmatpush1.xpose.msra.mxu0 0.0
    %632 = vmatprep.subr.mxu0 0.0
    %633 = vmatpush1.xpose.msra.mxu0 0.0
    %634 = vmatprep.subr.mxu0 0.0
    %635 = vmatpush1.xpose.msra.mxu0 0.0
    %636 = vmatprep.subr.mxu0 0.0
    %637 = vmatpush1.xpose.msra.mxu0 0.0
    %638 = vmatprep.subr.mxu0 0.0
    %639 = vmatpush1.xpose.msra.mxu0 0.0
    %640 = vmatprep.subr.mxu0 0.0
    %641 = vmatpush1.xpose.msra.mxu0 0.0
    %642 = vmatprep.subr.mxu0 0.0
    %643 = vmatpush1.xpose.msra.mxu0 0.0
    %644 = vmatprep.subr.mxu0 0.0
    %645 = vmatpush1.xpose.msra.mxu0 0.0
    %646 = vmatprep.subr.mxu0 0.0
    %647 = vmatpush1.xpose.msra.mxu0 0.0
    %648 = vmatprep.subr.mxu0 0.0
    %649 = vmatpush1.xpose.msra.mxu0 0.0
    %650 = vmatprep.subr.mxu0 0.0
    %651 = vmatpush1.xpose.msra.mxu0 0.0
    %652 = vmatprep.subr.mxu0 0.0
    %653 = vmatpush1.xpose.msra.mxu0 0.0
    %654 = vmatprep.subr.mxu0 0.0
    %655 = vmatpush1.xpose.msra.mxu0 0.0
    %656 = vmatprep.subr.mxu0 0.0
    %657 = vmatpush1.xpose.msra.mxu0 0.0
    %658 = vmatprep.subr.mxu0 0.0
    %659 = vmatpush1.xpose.msra.mxu0 0.0
    %660 = vmatprep.mubr.f32.mxu0 0.0
    %661 = vmatmul.mubr.f32.gmra.mrb[0].mxu0 %v592
    %v662 = vpop.f32.mrb[0].mxu0
    %v663 = vadd.f32 0.0, %v662
    %v664 = vpop.f32.mrb[0].mxu0
    %665 = vdwg.mxu0
    %667 = vrot.lane.b32.xlu0 %v271, 120
    %v668 = vpop.permute.xlu0 %667
    %v669 = vsel %vm360, %v271, 0
    %v671 = vsel %vm360, %v668, 0
    %673 = vmatprep.subr.mxu0 0.0
    %674 = vmatpush1.xpose.msra.mxu0 %v671
    %675 = vmatprep.subr.mxu0 0.0
    %676 = vmatpush1.xpose.msra.mxu0 0.0
    %677 = vmatprep.subr.mxu0 0.0
    %678 = vmatpush1.xpose.msra.mxu0 0.0
    %679 = vmatprep.subr.mxu0 0.0
    %680 = vmatpush1.xpose.msra.mxu0 0.0
    %681 = vmatprep.subr.mxu0 0.0
    %682 = vmatpush1.xpose.msra.mxu0 0.0
    %683 = vmatprep.subr.mxu0 0.0
    %684 = vmatpush1.xpose.msra.mxu0 0.0
    %685 = vmatprep.subr.mxu0 0.0
    %686 = vmatpush1.xpose.msra.mxu0 0.0
    %687 = vmatprep.subr.mxu0 0.0
    %688 = vmatpush1.xpose.msra.mxu0 0.0
    %689 = vmatprep.subr.mxu0 0.0
    %690 = vmatpush1.xpose.msra.mxu0 0.0
    %691 = vmatprep.subr.mxu0 0.0
    %692 = vmatpush1.xpose.msra.mxu0 0.0
    %693 = vmatprep.subr.mxu0 0.0
    %694 = vmatpush1.xpose.msra.mxu0 0.0
    %695 = vmatprep.subr.mxu0 0.0
    %696 = vmatpush1.xpose.msra.mxu0 0.0
    %697 = vmatprep.subr.mxu0 0.0
    %698 = vmatpush1.xpose.msra.mxu0 0.0
    %699 = vmatprep.subr.mxu0 0.0
    %700 = vmatpush1.xpose.msra.mxu0 0.0
    %701 = vmatprep.subr.mxu0 0.0
    %702 = vmatpush1.xpose.msra.mxu0 0.0
    %703 = vmatprep.subr.mxu0 0.0
    %704 = vmatpush1.xpose.msra.mxu0 0.0
    %705 = vmatprep.subr.mxu0 0.0
    %706 = vmatpush1.xpose.msra.mxu0 0.0
    %707 = vmatprep.subr.mxu0 0.0
    %708 = vmatpush1.xpose.msra.mxu0 0.0
    %709 = vmatprep.subr.mxu0 0.0
    %710 = vmatpush1.xpose.msra.mxu0 0.0
    %711 = vmatprep.subr.mxu0 0.0
    %712 = vmatpush1.xpose.msra.mxu0 0.0
    %713 = vmatprep.subr.mxu0 0.0
    %714 = vmatpush1.xpose.msra.mxu0 0.0
    %715 = vmatprep.subr.mxu0 0.0
    %716 = vmatpush1.xpose.msra.mxu0 0.0
    %717 = vmatprep.subr.mxu0 0.0
    %718 = vmatpush1.xpose.msra.mxu0 0.0
    %719 = vmatprep.subr.mxu0 0.0
    %720 = vmatpush1.xpose.msra.mxu0 0.0
    %721 = vmatprep.subr.mxu0 0.0
    %722 = vmatpush1.xpose.msra.mxu0 0.0
    %723 = vmatprep.subr.mxu0 0.0
    %724 = vmatpush1.xpose.msra.mxu0 0.0
    %725 = vmatprep.subr.mxu0 0.0
    %726 = vmatpush1.xpose.msra.mxu0 0.0
    %727 = vmatprep.subr.mxu0 0.0
    %728 = vmatpush1.xpose.msra.mxu0 0.0
    %729 = vmatprep.subr.mxu0 0.0
    %730 = vmatpush1.xpose.msra.mxu0 0.0
    %731 = vmatprep.subr.mxu0 0.0
    %732 = vmatpush1.xpose.msra.mxu0 0.0
    %733 = vmatprep.subr.mxu0 0.0
    %734 = vmatpush1.xpose.msra.mxu0 0.0
    %735 = vmatprep.subr.mxu0 0.0
    %736 = vmatpush1.xpose.msra.mxu0 0.0
    %737 = vmatprep.mubr.f32.mxu0 0.0
    %738 = vmatmul.mubr.f32.gmra.mrb[0].mxu0 %v669
    %v739 = vpop.f32.mrb[0].mxu0
    %v740 = vadd.f32 0.0, %v739
    %v741 = vpop.f32.mrb[0].mxu0
    %742 = vdwg.mxu0
    %744 = vrot.lane.b32.xlu0 %v276, 120
    %v745 = vpop.permute.xlu0 %744
    %v746 = vsel %vm360, %v276, 0
    %v748 = vsel %vm360, %v745, 0
    %750 = vmatprep.subr.mxu0 0.0
    %751 = vmatpush1.xpose.msra.mxu0 %v748
    %752 = vmatprep.subr.mxu0 0.0
    %753 = vmatpush1.xpose.msra.mxu0 0.0
    %754 = vmatprep.subr.mxu0 0.0
    %755 = vmatpush1.xpose.msra.mxu0 0.0
    %756 = vmatprep.subr.mxu0 0.0
    %757 = vmatpush1.xpose.msra.mxu0 0.0
    %758 = vmatprep.subr.mxu0 0.0
    %759 = vmatpush1.xpose.msra.mxu0 0.0
    %760 = vmatprep.subr.mxu0 0.0
    %761 = vmatpush1.xpose.msra.mxu0 0.0
    %762 = vmatprep.subr.mxu0 0.0
    %763 = vmatpush1.xpose.msra.mxu0 0.0
    %764 = vmatprep.subr.mxu0 0.0
    %765 = vmatpush1.xpose.msra.mxu0 0.0
    %766 = vmatprep.subr.mxu0 0.0
    %767 = vmatpush1.xpose.msra.mxu0 0.0
    %768 = vmatprep.subr.mxu0 0.0
    %769 = vmatpush1.xpose.msra.mxu0 0.0
    %770 = vmatprep.subr.mxu0 0.0
    %771 = vmatpush1.xpose.msra.mxu0 0.0
    %772 = vmatprep.subr.mxu0 0.0
    %773 = vmatpush1.xpose.msra.mxu0 0.0
    %774 = vmatprep.subr.mxu0 0.0
    %775 = vmatpush1.xpose.msra.mxu0 0.0
    %776 = vmatprep.subr.mxu0 0.0
    %777 = vmatpush1.xpose.msra.mxu0 0.0
    %778 = vmatprep.subr.mxu0 0.0
    %779 = vmatpush1.xpose.msra.mxu0 0.0
    %780 = vmatprep.subr.mxu0 0.0
    %781 = vmatpush1.xpose.msra.mxu0 0.0
    %782 = vmatprep.subr.mxu0 0.0
    %783 = vmatpush1.xpose.msra.mxu0 0.0
    %784 = vmatprep.subr.mxu0 0.0
    %785 = vmatpush1.xpose.msra.mxu0 0.0
    %786 = vmatprep.subr.mxu0 0.0
    %787 = vmatpush1.xpose.msra.mxu0 0.0
    %788 = vmatprep.subr.mxu0 0.0
    %789 = vmatpush1.xpose.msra.mxu0 0.0
    %790 = vmatprep.subr.mxu0 0.0
    %791 = vmatpush1.xpose.msra.mxu0 0.0
    %792 = vmatprep.subr.mxu0 0.0
    %793 = vmatpush1.xpose.msra.mxu0 0.0
    %794 = vmatprep.subr.mxu0 0.0
    %795 = vmatpush1.xpose.msra.mxu0 0.0
    %796 = vmatprep.subr.mxu0 0.0
    %797 = vmatpush1.xpose.msra.mxu0 0.0
    %798 = vmatprep.subr.mxu0 0.0
    %799 = vmatpush1.xpose.msra.mxu0 0.0
    %800 = vmatprep.subr.mxu0 0.0
    %801 = vmatpush1.xpose.msra.mxu0 0.0
    %802 = vmatprep.subr.mxu0 0.0
    %803 = vmatpush1.xpose.msra.mxu0 0.0
    %804 = vmatprep.subr.mxu0 0.0
    %805 = vmatpush1.xpose.msra.mxu0 0.0
    %806 = vmatprep.subr.mxu0 0.0
    %807 = vmatpush1.xpose.msra.mxu0 0.0
    %808 = vmatprep.subr.mxu0 0.0
    %809 = vmatpush1.xpose.msra.mxu0 0.0
    %810 = vmatprep.subr.mxu0 0.0
    %811 = vmatpush1.xpose.msra.mxu0 0.0
    %812 = vmatprep.subr.mxu0 0.0
    %813 = vmatpush1.xpose.msra.mxu0 0.0
    %814 = vmatprep.mubr.f32.mxu0 0.0
    %815 = vmatmul.mubr.f32.gmra.mrb[0].mxu0 %v746
    %v816 = vpop.f32.mrb[0].mxu0
    %v817 = vadd.f32 0.0, %v816
    %v818 = vpop.f32.mrb[0].mxu0
    %819 = vdwg.mxu0
    %821 = vrot.lane.b32.xlu0 %v349, 120
    %v822 = vpop.permute.xlu0 %821
    %v823 = vsel %vm360, %v349, 0
    %v825 = vsel %vm360, %v822, 0
    %827 = vmatprep.subr.mxu0 0.0
    %828 = vmatpush1.xpose.msra.mxu0 %v825
    %829 = vmatprep.subr.mxu0 0.0
    %830 = vmatpush1.xpose.msra.mxu0 0.0
    %831 = vmatprep.subr.mxu0 0.0
    %832 = vmatpush1.xpose.msra.mxu0 0.0
    %833 = vmatprep.subr.mxu0 0.0
    %834 = vmatpush1.xpose.msra.mxu0 0.0
    %835 = vmatprep.subr.mxu0 0.0
    %836 = vmatpush1.xpose.msra.mxu0 0.0
    %837 = vmatprep.subr.mxu0 0.0
    %838 = vmatpush1.xpose.msra.mxu0 0.0
    %839 = vmatprep.subr.mxu0 0.0
    %840 = vmatpush1.xpose.msra.mxu0 0.0
    %841 = vmatprep.subr.mxu0 0.0
    %842 = vmatpush1.xpose.msra.mxu0 0.0
    %843 = vmatprep.subr.mxu0 0.0
    %844 = vmatpush1.xpose.msra.mxu0 0.0
    %845 = vmatprep.subr.mxu0 0.0
    %846 = vmatpush1.xpose.msra.mxu0 0.0
    %847 = vmatprep.subr.mxu0 0.0
    %848 = vmatpush1.xpose.msra.mxu0 0.0
    %849 = vmatprep.subr.mxu0 0.0
    %850 = vmatpush1.xpose.msra.mxu0 0.0
    %851 = vmatprep.subr.mxu0 0.0
    %852 = vmatpush1.xpose.msra.mxu0 0.0
    %853 = vmatprep.subr.mxu0 0.0
    %854 = vmatpush1.xpose.msra.mxu0 0.0
    %855 = vmatprep.subr.mxu0 0.0
    %856 = vmatpush1.xpose.msra.mxu0 0.0
    %857 = vmatprep.subr.mxu0 0.0
    %858 = vmatpush1.xpose.msra.mxu0 0.0
    %859 = vmatprep.subr.mxu0 0.0
    %860 = vmatpush1.xpose.msra.mxu0 0.0
    %861 = vmatprep.subr.mxu0 0.0
    %862 = vmatpush1.xpose.msra.mxu0 0.0
    %863 = vmatprep.subr.mxu0 0.0
    %864 = vmatpush1.xpose.msra.mxu0 0.0
    %865 = vmatprep.subr.mxu0 0.0
    %866 = vmatpush1.xpose.msra.mxu0 0.0
    %867 = vmatprep.subr.mxu0 0.0
    %868 = vmatpush1.xpose.msra.mxu0 0.0
    %869 = vmatprep.subr.mxu0 0.0
    %870 = vmatpush1.xpose.msra.mxu0 0.0
    %871 = vmatprep.subr.mxu0 0.0
    %872 = vmatpush1.xpose.msra.mxu0 0.0
    %873 = vmatprep.subr.mxu0 0.0
    %874 = vmatpush1.xpose.msra.mxu0 0.0
    %875 = vmatprep.subr.mxu0 0.0
    %876 = vmatpush1.xpose.msra.mxu0 0.0
    %877 = vmatprep.subr.mxu0 0.0
    %878 = vmatpush1.xpose.msra.mxu0 0.0
    %879 = vmatprep.subr.mxu0 0.0
    %880 = vmatpush1.xpose.msra.mxu0 0.0
    %881 = vmatprep.subr.mxu0 0.0
    %882 = vmatpush1.xpose.msra.mxu0 0.0
    %883 = vmatprep.subr.mxu0 0.0
    %884 = vmatpush1.xpose.msra.mxu0 0.0
    %885 = vmatprep.subr.mxu0 0.0
    %886 = vmatpush1.xpose.msra.mxu0 0.0
    %887 = vmatprep.subr.mxu0 0.0
    %888 = vmatpush1.xpose.msra.mxu0 0.0
    %889 = vmatprep.subr.mxu0 0.0
    %890 = vmatpush1.xpose.msra.mxu0 0.0
    %891 = vmatprep.mubr.f32.mxu0 0.0
    %892 = vmatmul.mubr.f32.gmra.mrb[0].mxu0 %v823
    %v893 = vpop.f32.mrb[0].mxu0
    %v894 = vadd.f32 0.0, %v893
    %v895 = vpop.f32.mrb[0].mxu0
    %896 = vdwg.mxu0
    %898 = vrot.lane.b32.xlu0 %v354, 120
    %v899 = vpop.permute.xlu0 %898
    %v900 = vsel %vm360, %v354, 0
    %v902 = vsel %vm360, %v899, 0
    %904 = vmatprep.subr.mxu0 0.0
    %905 = vmatpush1.xpose.msra.mxu0 %v902
    %906 = vmatprep.subr.mxu0 0.0
    %907 = vmatpush1.xpose.msra.mxu0 0.0
    %908 = vmatprep.subr.mxu0 0.0
    %909 = vmatpush1.xpose.msra.mxu0 0.0
    %910 = vmatprep.subr.mxu0 0.0
    %911 = vmatpush1.xpose.msra.mxu0 0.0
    %912 = vmatprep.subr.mxu0 0.0
    %913 = vmatpush1.xpose.msra.mxu0 0.0
    %914 = vmatprep.subr.mxu0 0.0
    %915 = vmatpush1.xpose.msra.mxu0 0.0
    %916 = vmatprep.subr.mxu0 0.0
    %917 = vmatpush1.xpose.msra.mxu0 0.0
    %918 = vmatprep.subr.mxu0 0.0
    %919 = vmatpush1.xpose.msra.mxu0 0.0
    %920 = vmatprep.subr.mxu0 0.0
    %921 = vmatpush1.xpose.msra.mxu0 0.0
    %922 = vmatprep.subr.mxu0 0.0
    %923 = vmatpush1.xpose.msra.mxu0 0.0
    %924 = vmatprep.subr.mxu0 0.0
    %925 = vmatpush1.xpose.msra.mxu0 0.0
    %926 = vmatprep.subr.mxu0 0.0
    %927 = vmatpush1.xpose.msra.mxu0 0.0
    %928 = vmatprep.subr.mxu0 0.0
    %929 = vmatpush1.xpose.msra.mxu0 0.0
    %930 = vmatprep.subr.mxu0 0.0
    %931 = vmatpush1.xpose.msra.mxu0 0.0
    %932 = vmatprep.subr.mxu0 0.0
    %933 = vmatpush1.xpose.msra.mxu0 0.0
    %934 = vmatprep.subr.mxu0 0.0
    %935 = vmatpush1.xpose.msra.mxu0 0.0
    %936 = vmatprep.subr.mxu0 0.0
    %937 = vmatpush1.xpose.msra.mxu0 0.0
    %938 = vmatprep.subr.mxu0 0.0
    %939 = vmatpush1.xpose.msra.mxu0 0.0
    %940 = vmatprep.subr.mxu0 0.0
    %941 = vmatpush1.xpose.msra.mxu0 0.0
    %942 = vmatprep.subr.mxu0 0.0
    %943 = vmatpush1.xpose.msra.mxu0 0.0
    %944 = vmatprep.subr.mxu0 0.0
    %945 = vmatpush1.xpose.msra.mxu0 0.0
    %946 = vmatprep.subr.mxu0 0.0
    %947 = vmatpush1.xpose.msra.mxu0 0.0
    %948 = vmatprep.subr.mxu0 0.0
    %949 = vmatpush1.xpose.msra.mxu0 0.0
    %950 = vmatprep.subr.mxu0 0.0
    %951 = vmatpush1.xpose.msra.mxu0 0.0
    %952 = vmatprep.subr.mxu0 0.0
    %953 = vmatpush1.xpose.msra.mxu0 0.0
    %954 = vmatprep.subr.mxu0 0.0
    %955 = vmatpush1.xpose.msra.mxu0 0.0
    %956 = vmatprep.subr.mxu0 0.0
    %957 = vmatpush1.xpose.msra.mxu0 0.0
    %958 = vmatprep.subr.mxu0 0.0
    %959 = vmatpush1.xpose.msra.mxu0 0.0
    %960 = vmatprep.subr.mxu0 0.0
    %961 = vmatpush1.xpose.msra.mxu0 0.0
    %962 = vmatprep.subr.mxu0 0.0
    %963 = vmatpush1.xpose.msra.mxu0 0.0
    %964 = vmatprep.subr.mxu0 0.0
    %965 = vmatpush1.xpose.msra.mxu0 0.0
    %966 = vmatprep.subr.mxu0 0.0
    %967 = vmatpush1.xpose.msra.mxu0 0.0
    %968 = vmatprep.mubr.f32.mxu0 0.0
    %969 = vmatmul.mubr.f32.gmra.mrb[0].mxu0 %v900
    %v970 = vpop.f32.mrb[0].mxu0
    %v971 = vadd.f32 0.0, %v970
    %v972 = vpop.f32.mrb[0].mxu0
    %973 = vdwg.mxu0
    %v974 = vsel %vm360, %v432, -inf
    %975 = vmax.xlane.f32.xlu0 %v974
    %v976 = vpop.xlane.xlu0 %975
    %v977 = vsel %vm360, %v509, -inf
    %978 = vmax.xlane.f32.xlu0 %v977
    %v979 = vpop.xlane.xlu0 %978
    %v980 = vsel %vm360, %v586, -inf
    %981 = vmax.xlane.f32.xlu0 %v980
    %v982 = vpop.xlane.xlu0 %981
    %v983 = vsel %vm360, %v663, -inf
    %984 = vmax.xlane.f32.xlu0 %v983
    %v985 = vpop.xlane.xlu0 %984
    %v986 = vsel %vm360, %v740, -inf
    %987 = vmax.xlane.f32.xlu0 %v986
    %v988 = vpop.xlane.xlu0 %987
    %v989 = vsel %vm360, %v817, -inf
    %990 = vmax.xlane.f32.xlu0 %v989
    %v991 = vpop.xlane.xlu0 %990
    %v992 = vsel %vm360, %v894, -inf
    %993 = vmax.xlane.f32.xlu0 %v992
    %v994 = vpop.xlane.xlu0 %993
    %v995 = vsel %vm360, %v971, -inf
    %996 = vmax.xlane.f32.xlu0 %v995
    %v997 = vpop.xlane.xlu0 %996
    %v998 = vsub.f32 %v432, %v976
    %v999 = vsub.f32 %v509, %v979
    %v1000 = vsub.f32 %v586, %v982
    %v1001 = vsub.f32 %v663, %v985
    %v1002 = vsub.f32 %v740, %v988
    %v1003 = vsub.f32 %v817, %v991
    %v1004 = vsub.f32 %v894, %v994
    %v1005 = vsub.f32 %v971, %v997
    %v1006 = vmul.f32 %v998, 1.442695
    %v1007 = vpow.pop %v1006
    %v1008 = vmul.f32 %v999, 1.442695
    %v1009 = vpow.pop %v1008
    %v1010 = vmul.f32 %v1000, 1.442695
    %v1011 = vpow.pop %v1010
    %v1012 = vmul.f32 %v1001, 1.442695
    %v1013 = vpow.pop %v1012
    %v1014 = vmul.f32 %v1002, 1.442695
    %v1015 = vpow.pop %v1014
    %v1016 = vmul.f32 %v1003, 1.442695
    %v1017 = vpow.pop %v1016
    %v1018 = vmul.f32 %v1004, 1.442695
    %v1019 = vpow.pop %v1018
    %v1020 = vmul.f32 %v1005, 1.442695
    %v1021 = vpow.pop %v1020
    %v1022 = vsel %vm360, %v1007, 0.0
    %1023 = vadd.xlane.f32.xlu0 %v1022
    %v1024 = vpop.xlane.xlu0 %1023
    %v1025 = vsel %vm360, %v1009, 0.0
    %1026 = vadd.xlane.f32.xlu0 %v1025
    %v1027 = vpop.xlane.xlu0 %1026
    %v1028 = vsel %vm360, %v1011, 0.0
    %1029 = vadd.xlane.f32.xlu0 %v1028
    %v1030 = vpop.xlane.xlu0 %1029
    %v1031 = vsel %vm360, %v1013, 0.0
    %1032 = vadd.xlane.f32.xlu0 %v1031
    %v1033 = vpop.xlane.xlu0 %1032
    %v1034 = vsel %vm360, %v1015, 0.0
    %1035 = vadd.xlane.f32.xlu0 %v1034
    %v1036 = vpop.xlane.xlu0 %1035
    %v1037 = vsel %vm360, %v1017, 0.0
    %1038 = vadd.xlane.f32.xlu0 %v1037
    %v1039 = vpop.xlane.xlu0 %1038
    %v1040 = vsel %vm360, %v1019, 0.0
    %1041 = vadd.xlane.f32.xlu0 %v1040
    %v1042 = vpop.xlane.xlu0 %1041
    %v1043 = vsel %vm360, %v1021, 0.0
    %1044 = vadd.xlane.f32.xlu0 %v1043
    %v1045 = vpop.xlane.xlu0 %1044
    %v1046 = vrcp.pop %v1024
    %v1047 = vrcp.pop %v1027
    %v1048 = vrcp.pop %v1030
    %v1049 = vrcp.pop %v1033
    %v1050 = vrcp.pop %v1036
    %v1051 = vrcp.pop %v1039
    %v1052 = vrcp.pop %v1042
    %v1053 = vrcp.pop %v1045
    %v1054 = vmul.f32 %v1024, %v1046
    %v1055 = vmul.f32 %v1027, %v1047
    %v1056 = vmul.f32 %v1030, %v1048
    %v1057 = vmul.f32 %v1033, %v1049
    %v1058 = vmul.f32 %v1036, %v1050
    %v1059 = vmul.f32 %v1039, %v1051
    %v1060 = vmul.f32 %v1042, %v1052
    %v1061 = vmul.f32 %v1045, %v1053
    %v1062 = vsub.f32 2.0, %v1054
    %v1063 = vsub.f32 2.0, %v1055
    %v1064 = vsub.f32 2.0, %v1056
    %v1065 = vsub.f32 2.0, %v1057
    %v1066 = vsub.f32 2.0, %v1058
    %v1067 = vsub.f32 2.0, %v1059
    %v1068 = vsub.f32 2.0, %v1060
    %v1069 = vsub.f32 2.0, %v1061
    %v1070 = vmul.f32 %v1046, %v1062
    %v1071 = vmul.f32 %v1047, %v1063
    %v1072 = vmul.f32 %v1048, %v1064
    %v1073 = vmul.f32 %v1049, %v1065
    %v1074 = vmul.f32 %v1050, %v1066
    %v1075 = vmul.f32 %v1051, %v1067
    %v1076 = vmul.f32 %v1052, %v1068
    %v1077 = vmul.f32 %v1053, %v1069
    %v1078 = vmul.f32 %v1007, %v1070
    %v1079 = vmul.f32 %v1009, %v1071
    %v1080 = vmul.f32 %v1011, %v1072
    %v1081 = vmul.f32 %v1013, %v1073
    %v1082 = vmul.f32 %v1015, %v1074
    %v1083 = vmul.f32 %v1017, %v1075
    %v1084 = vmul.f32 %v1019, %v1076
    %v1085 = vmul.f32 %v1021, %v1077
    %1086 = vrot.lane.b32.xlu0 %v115, 112
    %v1087 = vpop.permute.xlu0 %1086
    %v1090 = vsel %vm360, %v1078, 0
    %1092 = vmatprep.subr.mxu0 0.0
    %1093 = vmatpush1.msra.mxu0 %v1087
    %1094 = vmatprep.subr.mxu0 0.0
    %1095 = vmatpush1.msra.mxu0 0.0
    %1096 = vmatprep.subr.mxu0 0.0
    %1097 = vmatpush1.msra.mxu0 0.0
    %1098 = vmatprep.subr.mxu0 0.0
    %1099 = vmatpush1.msra.mxu0 0.0
    %1100 = vmatprep.subr.mxu0 0.0
    %1101 = vmatpush1.msra.mxu0 0.0
    %1102 = vmatprep.subr.mxu0 0.0
    %1103 = vmatpush1.msra.mxu0 0.0
    %1104 = vmatprep.subr.mxu0 0.0
    %1105 = vmatpush1.msra.mxu0 0.0
    %1106 = vmatprep.subr.mxu0 0.0
    %1107 = vmatpush1.msra.mxu0 0.0
    %1108 = vmatprep.subr.mxu0 0.0
    %1109 = vmatpush1.msra.mxu0 0.0
    %1110 = vmatprep.subr.mxu0 0.0
    %1111 = vmatpush1.msra.mxu0 0.0
    %1112 = vmatprep.subr.mxu0 0.0
    %1113 = vmatpush1.msra.mxu0 0.0
    %1114 = vmatprep.subr.mxu0 0.0
    %1115 = vmatpush1.msra.mxu0 0.0
    %1116 = vmatprep.subr.mxu0 0.0
    %1117 = vmatpush1.msra.mxu0 0.0
    %1118 = vmatprep.subr.mxu0 0.0
    %1119 = vmatpush1.msra.mxu0 0.0
    %1120 = vmatprep.subr.mxu0 0.0
    %1121 = vmatpush1.msra.mxu0 0.0
    %1122 = vmatprep.subr.mxu0 0.0
    %1123 = vmatpush1.msra.mxu0 0.0
    %1124 = vmatprep.subr.mxu0 0.0
    %1125 = vmatpush1.msra.mxu0 0.0
    %1126 = vmatprep.subr.mxu0 0.0
    %1127 = vmatpush1.msra.mxu0 0.0
    %1128 = vmatprep.subr.mxu0 0.0
    %1129 = vmatpush1.msra.mxu0 0.0
    %1130 = vmatprep.subr.mxu0 0.0
    %1131 = vmatpush1.msra.mxu0 0.0
    %1132 = vmatprep.subr.mxu0 0.0
    %1133 = vmatpush1.msra.mxu0 0.0
    %1134 = vmatprep.subr.mxu0 0.0
    %1135 = vmatpush1.msra.mxu0 0.0
    %1136 = vmatprep.subr.mxu0 0.0
    %1137 = vmatpush1.msra.mxu0 0.0
    %1138 = vmatprep.subr.mxu0 0.0
    %1139 = vmatpush1.msra.mxu0 0.0
    %1140 = vmatprep.subr.mxu0 0.0
    %1141 = vmatpush1.msra.mxu0 0.0
    %1142 = vmatprep.subr.mxu0 0.0
    %1143 = vmatpush1.msra.mxu0 0.0
    %1144 = vmatprep.subr.mxu0 0.0
    %1145 = vmatpush1.msra.mxu0 0.0
    %1146 = vmatprep.subr.mxu0 0.0
    %1147 = vmatpush1.msra.mxu0 0.0
    %1148 = vmatprep.subr.mxu0 0.0
    %1149 = vmatpush1.msra.mxu0 0.0
    %1150 = vmatprep.subr.mxu0 0.0
    %1151 = vmatpush1.msra.mxu0 0.0
    %1152 = vmatprep.subr.mxu0 0.0
    %1153 = vmatpush1.msra.mxu0 0.0
    %1154 = vmatprep.subr.mxu0 0.0
    %1155 = vmatpush1.msra.mxu0 0.0
    %1156 = vmatprep.mubr.f32.mxu0 0.0
    %1157 = vmatmul.mubr.f32.gmra.mrb[0].mxu0 %v1090
    %v1158 = vpop.f32.mrb[0].mxu0
    %v1159 = vadd.f32 0.0, %v1158
    %v1160 = vpop.f32.mrb[0].mxu0
    %1161 = vdwg.mxu0
    %1162 = vrot.lane.b32.xlu0 %v120, 112
    %v1163 = vpop.permute.xlu0 %1162
    %v1166 = vsel %vm360, %v1079, 0
    %1168 = vmatprep.subr.mxu0 0.0
    %1169 = vmatpush1.msra.mxu0 %v1163
    %1170 = vmatprep.subr.mxu0 0.0
    %1171 = vmatpush1.msra.mxu0 0.0
    %1172 = vmatprep.subr.mxu0 0.0
    %1173 = vmatpush1.msra.mxu0 0.0
    %1174 = vmatprep.subr.mxu0 0.0
    %1175 = vmatpush1.msra.mxu0 0.0
    %1176 = vmatprep.subr.mxu0 0.0
    %1177 = vmatpush1.msra.mxu0 0.0
    %1178 = vmatprep.subr.mxu0 0.0
    %1179 = vmatpush1.msra.mxu0 0.0
    %1180 = vmatprep.subr.mxu0 0.0
    %1181 = vmatpush1.msra.mxu0 0.0
    %1182 = vmatprep.subr.mxu0 0.0
    %1183 = vmatpush1.msra.mxu0 0.0
    %1184 = vmatprep.subr.mxu0 0.0
    %1185 = vmatpush1.msra.mxu0 0.0
    %1186 = vmatprep.subr.mxu0 0.0
    %1187 = vmatpush1.msra.mxu0 0.0
    %1188 = vmatprep.subr.mxu0 0.0
    %1189 = vmatpush1.msra.mxu0 0.0
    %1190 = vmatprep.subr.mxu0 0.0
    %1191 = vmatpush1.msra.mxu0 0.0
    %1192 = vmatprep.subr.mxu0 0.0
    %1193 = vmatpush1.msra.mxu0 0.0
    %1194 = vmatprep.subr.mxu0 0.0
    %1195 = vmatpush1.msra.mxu0 0.0
    %1196 = vmatprep.subr.mxu0 0.0
    %1197 = vmatpush1.msra.mxu0 0.0
    %1198 = vmatprep.subr.mxu0 0.0
    %1199 = vmatpush1.msra.mxu0 0.0
    %1200 = vmatprep.subr.mxu0 0.0
    %1201 = vmatpush1.msra.mxu0 0.0
    %1202 = vmatprep.subr.mxu0 0.0
    %1203 = vmatpush1.msra.mxu0 0.0
    %1204 = vmatprep.subr.mxu0 0.0
    %1205 = vmatpush1.msra.mxu0 0.0
    %1206 = vmatprep.subr.mxu0 0.0
    %1207 = vmatpush1.msra.mxu0 0.0
    %1208 = vmatprep.subr.mxu0 0.0
    %1209 = vmatpush1.msra.mxu0 0.0
    %1210 = vmatprep.subr.mxu0 0.0
    %1211 = vmatpush1.msra.mxu0 0.0
    %1212 = vmatprep.subr.mxu0 0.0
    %1213 = vmatpush1.msra.mxu0 0.0
    %1214 = vmatprep.subr.mxu0 0.0
    %1215 = vmatpush1.msra.mxu0 0.0
    %1216 = vmatprep.subr.mxu0 0.0
    %1217 = vmatpush1.msra.mxu0 0.0
    %1218 = vmatprep.subr.mxu0 0.0
    %1219 = vmatpush1.msra.mxu0 0.0
    %1220 = vmatprep.subr.mxu0 0.0
    %1221 = vmatpush1.msra.mxu0 0.0
    %1222 = vmatprep.subr.mxu0 0.0
    %1223 = vmatpush1.msra.mxu0 0.0
    %1224 = vmatprep.subr.mxu0 0.0
    %1225 = vmatpush1.msra.mxu0 0.0
    %1226 = vmatprep.subr.mxu0 0.0
    %1227 = vmatpush1.msra.mxu0 0.0
    %1228 = vmatprep.subr.mxu0 0.0
    %1229 = vmatpush1.msra.mxu0 0.0
    %1230 = vmatprep.subr.mxu0 0.0
    %1231 = vmatpush1.msra.mxu0 0.0
    %1232 = vmatprep.mubr.f32.mxu0 0.0
    %1233 = vmatmul.mubr.f32.gmra.mrb[0].mxu0 %v1166
    %v1234 = vpop.f32.mrb[0].mxu0
    %v1235 = vadd.f32 0.0, %v1234
    %v1236 = vpop.f32.mrb[0].mxu0
    %1237 = vdwg.mxu0
    %1238 = vrot.lane.b32.xlu0 %v193, 112
    %v1239 = vpop.permute.xlu0 %1238
    %v1242 = vsel %vm360, %v1080, 0
    %1244 = vmatprep.subr.mxu0 0.0
    %1245 = vmatpush1.msra.mxu0 %v1239
    %1246 = vmatprep.subr.mxu0 0.0
    %1247 = vmatpush1.msra.mxu0 0.0
    %1248 = vmatprep.subr.mxu0 0.0
    %1249 = vmatpush1.msra.mxu0 0.0
    %1250 = vmatprep.subr.mxu0 0.0
    %1251 = vmatpush1.msra.mxu0 0.0
    %1252 = vmatprep.subr.mxu0 0.0
    %1253 = vmatpush1.msra.mxu0 0.0
    %1254 = vmatprep.subr.mxu0 0.0
    %1255 = vmatpush1.msra.mxu0 0.0
    %1256 = vmatprep.subr.mxu0 0.0
    %1257 = vmatpush1.msra.mxu0 0.0
    %1258 = vmatprep.subr.mxu0 0.0
    %1259 = vmatpush1.msra.mxu0 0.0
    %1260 = vmatprep.subr.mxu0 0.0
    %1261 = vmatpush1.msra.mxu0 0.0
    %1262 = vmatprep.subr.mxu0 0.0
    %1263 = vmatpush1.msra.mxu0 0.0
    %1264 = vmatprep.subr.mxu0 0.0
    %1265 = vmatpush1.msra.mxu0 0.0
    %1266 = vmatprep.subr.mxu0 0.0
    %1267 = vmatpush1.msra.mxu0 0.0
    %1268 = vmatprep.subr.mxu0 0.0
    %1269 = vmatpush1.msra.mxu0 0.0
    %1270 = vmatprep.subr.mxu0 0.0
    %1271 = vmatpush1.msra.mxu0 0.0
    %1272 = vmatprep.subr.mxu0 0.0
    %1273 = vmatpush1.msra.mxu0 0.0
    %1274 = vmatprep.subr.mxu0 0.0
    %1275 = vmatpush1.msra.mxu0 0.0
    %1276 = vmatprep.subr.mxu0 0.0
    %1277 = vmatpush1.msra.mxu0 0.0
    %1278 = vmatprep.subr.mxu0 0.0
    %1279 = vmatpush1.msra.mxu0 0.0
    %1280 = vmatprep.subr.mxu0 0.0
    %1281 = vmatpush1.msra.mxu0 0.0
    %1282 = vmatprep.subr.mxu0 0.0
    %1283 = vmatpush1.msra.mxu0 0.0
    %1284 = vmatprep.subr.mxu0 0.0
    %1285 = vmatpush1.msra.mxu0 0.0
    %1286 = vmatprep.subr.mxu0 0.0
    %1287 = vmatpush1.msra.mxu0 0.0
    %1288 = vmatprep.subr.mxu0 0.0
    %1289 = vmatpush1.msra.mxu0 0.0
    %1290 = vmatprep.subr.mxu0 0.0
    %1291 = vmatpush1.msra.mxu0 0.0
    %1292 = vmatprep.subr.mxu0 0.0
    %1293 = vmatpush1.msra.mxu0 0.0
    %1294 = vmatprep.subr.mxu0 0.0
    %1295 = vmatpush1.msra.mxu0 0.0
    %1296 = vmatprep.subr.mxu0 0.0
    %1297 = vmatpush1.msra.mxu0 0.0
    %1298 = vmatprep.subr.mxu0 0.0
    %1299 = vmatpush1.msra.mxu0 0.0
    %1300 = vmatprep.subr.mxu0 0.0
    %1301 = vmatpush1.msra.mxu0 0.0
    %1302 = vmatprep.subr.mxu0 0.0
    %1303 = vmatpush1.msra.mxu0 0.0
    %1304 = vmatprep.subr.mxu0 0.0
    %1305 = vmatpush1.msra.mxu0 0.0
    %1306 = vmatprep.subr.mxu0 0.0
    %1307 = vmatpush1.msra.mxu0 0.0
    %1308 = vmatprep.mubr.f32.mxu0 0.0
    %1309 = vmatmul.mubr.f32.gmra.mrb[0].mxu0 %v1242
    %v1310 = vpop.f32.mrb[0].mxu0
    %v1311 = vadd.f32 0.0, %v1310
    %v1312 = vpop.f32.mrb[0].mxu0
    %1313 = vdwg.mxu0
    %1314 = vrot.lane.b32.xlu0 %v198, 112
    %v1315 = vpop.permute.xlu0 %1314
    %v1318 = vsel %vm360, %v1081, 0
    %1320 = vmatprep.subr.mxu0 0.0
    %1321 = vmatpush1.msra.mxu0 %v1315
    %1322 = vmatprep.subr.mxu0 0.0
    %1323 = vmatpush1.msra.mxu0 0.0
    %1324 = vmatprep.subr.mxu0 0.0
    %1325 = vmatpush1.msra.mxu0 0.0
    %1326 = vmatprep.subr.mxu0 0.0
    %1327 = vmatpush1.msra.mxu0 0.0
    %1328 = vmatprep.subr.mxu0 0.0
    %1329 = vmatpush1.msra.mxu0 0.0
    %1330 = vmatprep.subr.mxu0 0.0
    %1331 = vmatpush1.msra.mxu0 0.0
    %1332 = vmatprep.subr.mxu0 0.0
    %1333 = vmatpush1.msra.mxu0 0.0
    %1334 = vmatprep.subr.mxu0 0.0
    %1335 = vmatpush1.msra.mxu0 0.0
    %1336 = vmatprep.subr.mxu0 0.0
    %1337 = vmatpush1.msra.mxu0 0.0
    %1338 = vmatprep.subr.mxu0 0.0
    %1339 = vmatpush1.msra.mxu0 0.0
    %1340 = vmatprep.subr.mxu0 0.0
    %1341 = vmatpush1.msra.mxu0 0.0
    %1342 = vmatprep.subr.mxu0 0.0
    %1343 = vmatpush1.msra.mxu0 0.0
    %1344 = vmatprep.subr.mxu0 0.0
    %1345 = vmatpush1.msra.mxu0 0.0
    %1346 = vmatprep.subr.mxu0 0.0
    %1347 = vmatpush1.msra.mxu0 0.0
    %1348 = vmatprep.subr.mxu0 0.0
    %1349 = vmatpush1.msra.mxu0 0.0
    %1350 = vmatprep.subr.mxu0 0.0
    %1351 = vmatpush1.msra.mxu0 0.0
    %1352 = vmatprep.subr.mxu0 0.0
    %1353 = vmatpush1.msra.mxu0 0.0
    %1354 = vmatprep.subr.mxu0 0.0
    %1355 = vmatpush1.msra.mxu0 0.0
    %1356 = vmatprep.subr.mxu0 0.0
    %1357 = vmatpush1.msra.mxu0 0.0
    %1358 = vmatprep.subr.mxu0 0.0
    %1359 = vmatpush1.msra.mxu0 0.0
    %1360 = vmatprep.subr.mxu0 0.0
    %1361 = vmatpush1.msra.mxu0 0.0
    %1362 = vmatprep.subr.mxu0 0.0
    %1363 = vmatpush1.msra.mxu0 0.0
    %1364 = vmatprep.subr.mxu0 0.0
    %1365 = vmatpush1.msra.mxu0 0.0
    %1366 = vmatprep.subr.mxu0 0.0
    %1367 = vmatpush1.msra.mxu0 0.0
    %1368 = vmatprep.subr.mxu0 0.0
    %1369 = vmatpush1.msra.mxu0 0.0
    %1370 = vmatprep.subr.mxu0 0.0
    %1371 = vmatpush1.msra.mxu0 0.0
    %1372 = vmatprep.subr.mxu0 0.0
    %1373 = vmatpush1.msra.mxu0 0.0
    %1374 = vmatprep.subr.mxu0 0.0
    %1375 = vmatpush1.msra.mxu0 0.0
    %1376 = vmatprep.subr.mxu0 0.0
    %1377 = vmatpush1.msra.mxu0 0.0
    %1378 = vmatprep.subr.mxu0 0.0
    %1379 = vmatpush1.msra.mxu0 0.0
    %1380 = vmatprep.subr.mxu0 0.0
    %1381 = vmatpush1.msra.mxu0 0.0
    %1382 = vmatprep.subr.mxu0 0.0
    %1383 = vmatpush1.msra.mxu0 0.0
    %1384 = vmatprep.mubr.f32.mxu0 0.0
    %1385 = vmatmul.mubr.f32.gmra.mrb[0].mxu0 %v1318
    %v1386 = vpop.f32.mrb[0].mxu0
    %v1387 = vadd.f32 0.0, %v1386
    %v1388 = vpop.f32.mrb[0].mxu0
    %1389 = vdwg.mxu0
    %1390 = vrot.lane.b32.xlu0 %v271, 112
    %v1391 = vpop.permute.xlu0 %1390
    %v1394 = vsel %vm360, %v1082, 0
    %1396 = vmatprep.subr.mxu0 0.0
    %1397 = vmatpush1.msra.mxu0 %v1391
    %1398 = vmatprep.subr.mxu0 0.0
    %1399 = vmatpush1.msra.mxu0 0.0
    %1400 = vmatprep.subr.mxu0 0.0
    %1401 = vmatpush1.msra.mxu0 0.0
    %1402 = vmatprep.subr.mxu0 0.0
    %1403 = vmatpush1.msra.mxu0 0.0
    %1404 = vmatprep.subr.mxu0 0.0
    %1405 = vmatpush1.msra.mxu0 0.0
    %1406 = vmatprep.subr.mxu0 0.0
    %1407 = vmatpush1.msra.mxu0 0.0
    %1408 = vmatprep.subr.mxu0 0.0
    %1409 = vmatpush1.msra.mxu0 0.0
    %1410 = vmatprep.subr.mxu0 0.0
    %1411 = vmatpush1.msra.mxu0 0.0
    %1412 = vmatprep.subr.mxu0 0.0
    %1413 = vmatpush1.msra.mxu0 0.0
    %1414 = vmatprep.subr.mxu0 0.0
    %1415 = vmatpush1.msra.mxu0 0.0
    %1416 = vmatprep.subr.mxu0 0.0
    %1417 = vmatpush1.msra.mxu0 0.0
    %1418 = vmatprep.subr.mxu0 0.0
    %1419 = vmatpush1.msra.mxu0 0.0
    %1420 = vmatprep.subr.mxu0 0.0
    %1421 = vmatpush1.msra.mxu0 0.0
    %1422 = vmatprep.subr.mxu0 0.0
    %1423 = vmatpush1.msra.mxu0 0.0
    %1424 = vmatprep.subr.mxu0 0.0
    %1425 = vmatpush1.msra.mxu0 0.0
    %1426 = vmatprep.subr.mxu0 0.0
    %1427 = vmatpush1.msra.mxu0 0.0
    %1428 = vmatprep.subr.mxu0 0.0
    %1429 = vmatpush1.msra.mxu0 0.0
    %1430 = vmatprep.subr.mxu0 0.0
    %1431 = vmatpush1.msra.mxu0 0.0
    %1432 = vmatprep.subr.mxu0 0.0
    %1433 = vmatpush1.msra.mxu0 0.0
    %1434 = vmatprep.subr.mxu0 0.0
    %1435 = vmatpush1.msra.mxu0 0.0
    %1436 = vmatprep.subr.mxu0 0.0
    %1437 = vmatpush1.msra.mxu0 0.0
    %1438 = vmatprep.subr.mxu0 0.0
    %1439 = vmatpush1.msra.mxu0 0.0
    %1440 = vmatprep.subr.mxu0 0.0
    %1441 = vmatpush1.msra.mxu0 0.0
    %1442 = vmatprep.subr.mxu0 0.0
    %1443 = vmatpush1.msra.mxu0 0.0
    %1444 = vmatprep.subr.mxu0 0.0
    %1445 = vmatpush1.msra.mxu0 0.0
    %1446 = vmatprep.subr.mxu0 0.0
    %1447 = vmatpush1.msra.mxu0 0.0
    %1448 = vmatprep.subr.mxu0 0.0
    %1449 = vmatpush1.msra.mxu0 0.0
    %1450 = vmatprep.subr.mxu0 0.0
    %1451 = vmatpush1.msra.mxu0 0.0
    %1452 = vmatprep.subr.mxu0 0.0
    %1453 = vmatpush1.msra.mxu0 0.0
    %1454 = vmatprep.subr.mxu0 0.0
    %1455 = vmatpush1.msra.mxu0 0.0
    %1456 = vmatprep.subr.mxu0 0.0
    %1457 = vmatpush1.msra.mxu0 0.0
    %1458 = vmatprep.subr.mxu0 0.0
    %1459 = vmatpush1.msra.mxu0 0.0
    %1460 = vmatprep.mubr.f32.mxu0 0.0
    %1461 = vmatmul.mubr.f32.gmra.mrb[0].mxu0 %v1394
    %v1462 = vpop.f32.mrb[0].mxu0
    %v1463 = vadd.f32 0.0, %v1462
    %v1464 = vpop.f32.mrb[0].mxu0
    %1465 = vdwg.mxu0
    %1466 = vrot.lane.b32.xlu0 %v276, 112
    %v1467 = vpop.permute.xlu0 %1466
    %v1470 = vsel %vm360, %v1083, 0
    %1472 = vmatprep.subr.mxu0 0.0
    %1473 = vmatpush1.msra.mxu0 %v1467
    %1474 = vmatprep.subr.mxu0 0.0
    %1475 = vmatpush1.msra.mxu0 0.0
    %1476 = vmatprep.subr.mxu0 0.0
    %1477 = vmatpush1.msra.mxu0 0.0
    %1478 = vmatprep.subr.mxu0 0.0
    %1479 = vmatpush1.msra.mxu0 0.0
    %1480 = vmatprep.subr.mxu0 0.0
    %1481 = vmatpush1.msra.mxu0 0.0
    %1482 = vmatprep.subr.mxu0 0.0
    %1483 = vmatpush1.msra.mxu0 0.0
    %1484 = vmatprep.subr.mxu0 0.0
    %1485 = vmatpush1.msra.mxu0 0.0
    %1486 = vmatprep.subr.mxu0 0.0
    %1487 = vmatpush1.msra.mxu0 0.0
    %1488 = vmatprep.subr.mxu0 0.0
    %1489 = vmatpush1.msra.mxu0 0.0
    %1490 = vmatprep.subr.mxu0 0.0
    %1491 = vmatpush1.msra.mxu0 0.0
    %1492 = vmatprep.subr.mxu0 0.0
    %1493 = vmatpush1.msra.mxu0 0.0
    %1494 = vmatprep.subr.mxu0 0.0
    %1495 = vmatpush1.msra.mxu0 0.0
    %1496 = vmatprep.subr.mxu0 0.0
    %1497 = vmatpush1.msra.mxu0 0.0
    %1498 = vmatprep.subr.mxu0 0.0
    %1499 = vmatpush1.msra.mxu0 0.0
    %1500 = vmatprep.subr.mxu0 0.0
    %1501 = vmatpush1.msra.mxu0 0.0
    %1502 = vmatprep.subr.mxu0 0.0
    %1503 = vmatpush1.msra.mxu0 0.0
    %1504 = vmatprep.subr.mxu0 0.0
    %1505 = vmatpush1.msra.mxu0 0.0
    %1506 = vmatprep.subr.mxu0 0.0
    %1507 = vmatpush1.msra.mxu0 0.0
    %1508 = vmatprep.subr.mxu0 0.0
    %1509 = vmatpush1.msra.mxu0 0.0
    %1510 = vmatprep.subr.mxu0 0.0
    %1511 = vmatpush1.msra.mxu0 0.0
    %1512 = vmatprep.subr.mxu0 0.0
    %1513 = vmatpush1.msra.mxu0 0.0
    %1514 = vmatprep.subr.mxu0 0.0
    %1515 = vmatpush1.msra.mxu0 0.0
    %1516 = vmatprep.subr.mxu0 0.0
    %1517 = vmatpush1.msra.mxu0 0.0
    %1518 = vmatprep.subr.mxu0 0.0
    %1519 = vmatpush1.msra.mxu0 0.0
    %1520 = vmatprep.subr.mxu0 0.0
    %1521 = vmatpush1.msra.mxu0 0.0
    %1522 = vmatprep.subr.mxu0 0.0
    %1523 = vmatpush1.msra.mxu0 0.0
    %1524 = vmatprep.subr.mxu0 0.0
    %1525 = vmatpush1.msra.mxu0 0.0
    %1526 = vmatprep.subr.mxu0 0.0
    %1527 = vmatpush1.msra.mxu0 0.0
    %1528 = vmatprep.subr.mxu0 0.0
    %1529 = vmatpush1.msra.mxu0 0.0
    %1530 = vmatprep.subr.mxu0 0.0
    %1531 = vmatpush1.msra.mxu0 0.0
    %1532 = vmatprep.subr.mxu0 0.0
    %1533 = vmatpush1.msra.mxu0 0.0
    %1534 = vmatprep.subr.mxu0 0.0
    %1535 = vmatpush1.msra.mxu0 0.0
    %1536 = vmatprep.mubr.f32.mxu0 0.0
    %1537 = vmatmul.mubr.f32.gmra.mrb[0].mxu0 %v1470
    %v1538 = vpop.f32.mrb[0].mxu0
    %v1539 = vadd.f32 0.0, %v1538
    %v1540 = vpop.f32.mrb[0].mxu0
    %1541 = vdwg.mxu0
    %1542 = vrot.lane.b32.xlu0 %v349, 112
    %v1543 = vpop.permute.xlu0 %1542
    %v1546 = vsel %vm360, %v1084, 0
    %1548 = vmatprep.subr.mxu0 0.0
    %1549 = vmatpush1.msra.mxu0 %v1543
    %1550 = vmatprep.subr.mxu0 0.0
    %1551 = vmatpush1.msra.mxu0 0.0
    %1552 = vmatprep.subr.mxu0 0.0
    %1553 = vmatpush1.msra.mxu0 0.0
    %1554 = vmatprep.subr.mxu0 0.0
    %1555 = vmatpush1.msra.mxu0 0.0
    %1556 = vmatprep.subr.mxu0 0.0
    %1557 = vmatpush1.msra.mxu0 0.0
    %1558 = vmatprep.subr.mxu0 0.0
    %1559 = vmatpush1.msra.mxu0 0.0
    %1560 = vmatprep.subr.mxu0 0.0
    %1561 = vmatpush1.msra.mxu0 0.0
    %1562 = vmatprep.subr.mxu0 0.0
    %1563 = vmatpush1.msra.mxu0 0.0
    %1564 = vmatprep.subr.mxu0 0.0
    %1565 = vmatpush1.msra.mxu0 0.0
    %1566 = vmatprep.subr.mxu0 0.0
    %1567 = vmatpush1.msra.mxu0 0.0
    %1568 = vmatprep.subr.mxu0 0.0
    %1569 = vmatpush1.msra.mxu0 0.0
    %1570 = vmatprep.subr.mxu0 0.0
    %1571 = vmatpush1.msra.mxu0 0.0
    %1572 = vmatprep.subr.mxu0 0.0
    %1573 = vmatpush1.msra.mxu0 0.0
    %1574 = vmatprep.subr.mxu0 0.0
    %1575 = vmatpush1.msra.mxu0 0.0
    %1576 = vmatprep.subr.mxu0 0.0
    %1577 = vmatpush1.msra.mxu0 0.0
    %1578 = vmatprep.subr.mxu0 0.0
    %1579 = vmatpush1.msra.mxu0 0.0
    %1580 = vmatprep.subr.mxu0 0.0
    %1581 = vmatpush1.msra.mxu0 0.0
    %1582 = vmatprep.subr.mxu0 0.0
    %1583 = vmatpush1.msra.mxu0 0.0
    %1584 = vmatprep.subr.mxu0 0.0
    %1585 = vmatpush1.msra.mxu0 0.0
    %1586 = vmatprep.subr.mxu0 0.0
    %1587 = vmatpush1.msra.mxu0 0.0
    %1588 = vmatprep.subr.mxu0 0.0
    %1589 = vmatpush1.msra.mxu0 0.0
    %1590 = vmatprep.subr.mxu0 0.0
    %1591 = vmatpush1.msra.mxu0 0.0
    %1592 = vmatprep.subr.mxu0 0.0
    %1593 = vmatpush1.msra.mxu0 0.0
    %1594 = vmatprep.subr.mxu0 0.0
    %1595 = vmatpush1.msra.mxu0 0.0
    %1596 = vmatprep.subr.mxu0 0.0
    %1597 = vmatpush1.msra.mxu0 0.0
    %1598 = vmatprep.subr.mxu0 0.0
    %1599 = vmatpush1.msra.mxu0 0.0
    %1600 = vmatprep.subr.mxu0 0.0
    %1601 = vmatpush1.msra.mxu0 0.0
    %1602 = vmatprep.subr.mxu0 0.0
    %1603 = vmatpush1.msra.mxu0 0.0
    %1604 = vmatprep.subr.mxu0 0.0
    %1605 = vmatpush1.msra.mxu0 0.0
    %1606 = vmatprep.subr.mxu0 0.0
    %1607 = vmatpush1.msra.mxu0 0.0
    %1608 = vmatprep.subr.mxu0 0.0
    %1609 = vmatpush1.msra.mxu0 0.0
    %1610 = vmatprep.subr.mxu0 0.0
    %1611 = vmatpush1.msra.mxu0 0.0
    %1612 = vmatprep.mubr.f32.mxu0 0.0
    %1613 = vmatmul.mubr.f32.gmra.mrb[0].mxu0 %v1546
    %v1614 = vpop.f32.mrb[0].mxu0
    %v1615 = vadd.f32 0.0, %v1614
    %v1616 = vpop.f32.mrb[0].mxu0
    %1617 = vdwg.mxu0
    %1618 = vrot.lane.b32.xlu0 %v354, 112
    %v1619 = vpop.permute.xlu0 %1618
    %v1622 = vsel %vm360, %v1085, 0
    %1624 = vmatprep.subr.mxu0 0.0
    %1625 = vmatpush1.msra.mxu0 %v1619
    %1626 = vmatprep.subr.mxu0 0.0
    %1627 = vmatpush1.msra.mxu0 0.0
    %1628 = vmatprep.subr.mxu0 0.0
    %1629 = vmatpush1.msra.mxu0 0.0
    %1630 = vmatprep.subr.mxu0 0.0
    %1631 = vmatpush1.msra.mxu0 0.0
    %1632 = vmatprep.subr.mxu0 0.0
    %1633 = vmatpush1.msra.mxu0 0.0
    %1634 = vmatprep.subr.mxu0 0.0
    %1635 = vmatpush1.msra.mxu0 0.0
    %1636 = vmatprep.subr.mxu0 0.0
    %1637 = vmatpush1.msra.mxu0 0.0
    %1638 = vmatprep.subr.mxu0 0.0
    %1639 = vmatpush1.msra.mxu0 0.0
    %1640 = vmatprep.subr.mxu0 0.0
    %1641 = vmatpush1.msra.mxu0 0.0
    %1642 = vmatprep.subr.mxu0 0.0
    %1643 = vmatpush1.msra.mxu0 0.0
    %1644 = vmatprep.subr.mxu0 0.0
    %1645 = vmatpush1.msra.mxu0 0.0
    %1646 = vmatprep.subr.mxu0 0.0
    %1647 = vmatpush1.msra.mxu0 0.0
    %1648 = vmatprep.subr.mxu0 0.0
    %1649 = vmatpush1.msra.mxu0 0.0
    %1650 = vmatprep.subr.mxu0 0.0
    %1651 = vmatpush1.msra.mxu0 0.0
    %1652 = vmatprep.subr.mxu0 0.0
    %1653 = vmatpush1.msra.mxu0 0.0
    %1654 = vmatprep.subr.mxu0 0.0
    %1655 = vmatpush1.msra.mxu0 0.0
    %1656 = vmatprep.subr.mxu0 0.0
    %1657 = vmatpush1.msra.mxu0 0.0
    %1658 = vmatprep.subr.mxu0 0.0
    %1659 = vmatpush1.msra.mxu0 0.0
    %1660 = vmatprep.subr.mxu0 0.0
    %1661 = vmatpush1.msra.mxu0 0.0
    %1662 = vmatprep.subr.mxu0 0.0
    %1663 = vmatpush1.msra.mxu0 0.0
    %1664 = vmatprep.subr.mxu0 0.0
    %1665 = vmatpush1.msra.mxu0 0.0
    %1666 = vmatprep.subr.mxu0 0.0
    %1667 = vmatpush1.msra.mxu0 0.0
    %1668 = vmatprep.subr.mxu0 0.0
    %1669 = vmatpush1.msra.mxu0 0.0
    %1670 = vmatprep.subr.mxu0 0.0
    %1671 = vmatpush1.msra.mxu0 0.0
    %1672 = vmatprep.subr.mxu0 0.0
    %1673 = vmatpush1.msra.mxu0 0.0
    %1674 = vmatprep.subr.mxu0 0.0
    %1675 = vmatpush1.msra.mxu0 0.0
    %1676 = vmatprep.subr.mxu0 0.0
    %1677 = vmatpush1.msra.mxu0 0.0
    %1678 = vmatprep.subr.mxu0 0.0
    %1679 = vmatpush1.msra.mxu0 0.0
    %1680 = vmatprep.subr.mxu0 0.0
    %1681 = vmatpush1.msra.mxu0 0.0
    %1682 = vmatprep.subr.mxu0 0.0
    %1683 = vmatpush1.msra.mxu0 0.0
    %1684 = vmatprep.subr.mxu0 0.0
    %1685 = vmatpush1.msra.mxu0 0.0
    %1686 = vmatprep.subr.mxu0 0.0
    %1687 = vmatpush1.msra.mxu0 0.0
    %1688 = vmatprep.mubr.f32.mxu0 0.0
    %1689 = vmatmul.mubr.f32.gmra.mrb[0].mxu0 %v1622
    %v1690 = vpop.f32.mrb[0].mxu0
    %v1691 = vadd.f32 0.0, %v1690
    %v1692 = vpop.f32.mrb[0].mxu0
    %1693 = vdwg.mxu0
    %v1694 = vld [vmem:[%s2] sm:$0xff]
    %v1695 = vld [vmem:[%s2 + $0x8] sm:$0xff]
    %v1696 = vld [vmem:[%s2 + $0x10] sm:$0xff]
    %v1697 = vld [vmem:[%s2 + $0x18] sm:$0xff]
    %v1698 = vld [vmem:[%s2 + $0x20] sm:$0x1]
    %v1700 = vsel %vm360, %v1159, 0
    %v1703 = vsel %vm360, %v1235, 0
    %1705 = vmatprep.subr.mxu0 0.0
    %1706 = vmatpush1.msra.mxu0 %v1694
    %1707 = vmatprep.subr.mxu0 0.0
    %1708 = vmatpush1.msra.mxu0 0.0
    %1709 = vmatprep.subr.mxu0 0.0
    %1710 = vmatpush1.msra.mxu0 0.0
    %1711 = vmatprep.subr.mxu0 0.0
    %1712 = vmatpush1.msra.mxu0 0.0
    %1713 = vmatprep.subr.mxu0 0.0
    %1714 = vmatpush1.msra.mxu0 0.0
    %1715 = vmatprep.subr.mxu0 0.0
    %1716 = vmatpush1.msra.mxu0 0.0
    %1717 = vmatprep.subr.mxu0 0.0
    %1718 = vmatpush1.msra.mxu0 0.0
    %1719 = vmatprep.subr.mxu0 0.0
    %1720 = vmatpush1.msra.mxu0 0.0
    %1721 = vmatprep.subr.mxu0 0.0
    %1722 = vmatpush1.msra.mxu0 0.0
    %1723 = vmatprep.subr.mxu0 0.0
    %1724 = vmatpush1.msra.mxu0 0.0
    %1725 = vmatprep.subr.mxu0 0.0
    %1726 = vmatpush1.msra.mxu0 0.0
    %1727 = vmatprep.subr.mxu0 0.0
    %1728 = vmatpush1.msra.mxu0 0.0
    %1729 = vmatprep.subr.mxu0 0.0
    %1730 = vmatpush1.msra.mxu0 0.0
    %1731 = vmatprep.subr.mxu0 0.0
    %1732 = vmatpush1.msra.mxu0 0.0
    %1733 = vmatprep.subr.mxu0 0.0
    %1734 = vmatpush1.msra.mxu0 0.0
    %1735 = vmatprep.subr.mxu0 0.0
    %1736 = vmatpush1.msra.mxu0 0.0
    %1737 = vmatprep.subr.mxu0 0.0
    %1738 = vmatpush1.msra.mxu0 0.0
    %1739 = vmatprep.subr.mxu0 0.0
    %1740 = vmatpush1.msra.mxu0 0.0
    %1741 = vmatprep.subr.mxu0 0.0
    %1742 = vmatpush1.msra.mxu0 0.0
    %1743 = vmatprep.subr.mxu0 0.0
    %1744 = vmatpush1.msra.mxu0 0.0
    %1745 = vmatprep.subr.mxu0 0.0
    %1746 = vmatpush1.msra.mxu0 0.0
    %1747 = vmatprep.subr.mxu0 0.0
    %1748 = vmatpush1.msra.mxu0 0.0
    %1749 = vmatprep.subr.mxu0 0.0
    %1750 = vmatpush1.msra.mxu0 0.0
    %1751 = vmatprep.subr.mxu0 0.0
    %1752 = vmatpush1.msra.mxu0 0.0
    %1753 = vmatprep.subr.mxu0 0.0
    %1754 = vmatpush1.msra.mxu0 0.0
    %1755 = vmatprep.subr.mxu0 0.0
    %1756 = vmatpush1.msra.mxu0 0.0
    %1757 = vmatprep.subr.mxu0 0.0
    %1758 = vmatpush1.msra.mxu0 0.0
    %1759 = vmatprep.subr.mxu0 0.0
    %1760 = vmatpush1.msra.mxu0 0.0
    %1761 = vmatprep.subr.mxu0 0.0
    %1762 = vmatpush1.msra.mxu0 0.0
    %1763 = vmatprep.subr.mxu0 0.0
    %1764 = vmatpush1.msra.mxu0 0.0
    %1765 = vmatprep.subr.mxu0 0.0
    %1766 = vmatpush1.msra.mxu0 0.0
    %1767 = vmatprep.subr.mxu0 0.0
    %1768 = vmatpush1.msra.mxu0 0.0
    %1769 = vmatprep.mubr.f32.mxu0 0.0
    %1770 = vmatmul.mubr.f32.gmra.mrb[0].mxu0 %v1700
    %v1771 = vpop.f32.mrb[0].mxu0
    %v1772 = vadd.f32 0.0, %v1771
    %v1773 = vpop.f32.mrb[0].mxu0
    %1774 = vmatprep.mubr.f32.mxu0 0.0
    %1775 = vmatmul.mubr.f32.gmra.mrb[0].mxu0 %v1703
    %v1776 = vpop.f32.mrb[0].mxu0
    %v1777 = vadd.f32 0.0, %v1776
    %v1778 = vpop.f32.mrb[0].mxu0
    %1779 = vdwg.mxu0
    %v1781 = vsel %vm360, %v1311, 0
    %v1784 = vsel %vm360, %v1387, 0
    %1786 = vmatprep.subr.mxu0 0.0
    %1787 = vmatpush1.msra.mxu0 %v1695
    %1788 = vmatprep.subr.mxu0 0.0
    %1789 = vmatpush1.msra.mxu0 0.0
    %1790 = vmatprep.subr.mxu0 0.0
    %1791 = vmatpush1.msra.mxu0 0.0
    %1792 = vmatprep.subr.mxu0 0.0
    %1793 = vmatpush1.msra.mxu0 0.0
    %1794 = vmatprep.subr.mxu0 0.0
    %1795 = vmatpush1.msra.mxu0 0.0
    %1796 = vmatprep.subr.mxu0 0.0
    %1797 = vmatpush1.msra.mxu0 0.0
    %1798 = vmatprep.subr.mxu0 0.0
    %1799 = vmatpush1.msra.mxu0 0.0
    %1800 = vmatprep.subr.mxu0 0.0
    %1801 = vmatpush1.msra.mxu0 0.0
    %1802 = vmatprep.subr.mxu0 0.0
    %1803 = vmatpush1.msra.mxu0 0.0
    %1804 = vmatprep.subr.mxu0 0.0
    %1805 = vmatpush1.msra.mxu0 0.0
    %1806 = vmatprep.subr.mxu0 0.0
    %1807 = vmatpush1.msra.mxu0 0.0
    %1808 = vmatprep.subr.mxu0 0.0
    %1809 = vmatpush1.msra.mxu0 0.0
    %1810 = vmatprep.subr.mxu0 0.0
    %1811 = vmatpush1.msra.mxu0 0.0
    %1812 = vmatprep.subr.mxu0 0.0
    %1813 = vmatpush1.msra.mxu0 0.0
    %1814 = vmatprep.subr.mxu0 0.0
    %1815 = vmatpush1.msra.mxu0 0.0
    %1816 = vmatprep.subr.mxu0 0.0
    %1817 = vmatpush1.msra.mxu0 0.0
    %1818 = vmatprep.subr.mxu0 0.0
    %1819 = vmatpush1.msra.mxu0 0.0
    %1820 = vmatprep.subr.mxu0 0.0
    %1821 = vmatpush1.msra.mxu0 0.0
    %1822 = vmatprep.subr.mxu0 0.0
    %1823 = vmatpush1.msra.mxu0 0.0
    %1824 = vmatprep.subr.mxu0 0.0
    %1825 = vmatpush1.msra.mxu0 0.0
    %1826 = vmatprep.subr.mxu0 0.0
    %1827 = vmatpush1.msra.mxu0 0.0
    %1828 = vmatprep.subr.mxu0 0.0
    %1829 = vmatpush1.msra.mxu0 0.0
    %1830 = vmatprep.subr.mxu0 0.0
    %1831 = vmatpush1.msra.mxu0 0.0
    %1832 = vmatprep.subr.mxu0 0.0
    %1833 = vmatpush1.msra.mxu0 0.0
    %1834 = vmatprep.subr.mxu0 0.0
    %1835 = vmatpush1.msra.mxu0 0.0
    %1836 = vmatprep.subr.mxu0 0.0
    %1837 = vmatpush1.msra.mxu0 0.0
    %1838 = vmatprep.subr.mxu0 0.0
    %1839 = vmatpush1.msra.mxu0 0.0
    %1840 = vmatprep.subr.mxu0 0.0
    %1841 = vmatpush1.msra.mxu0 0.0
    %1842 = vmatprep.subr.mxu0 0.0
    %1843 = vmatpush1.msra.mxu0 0.0
    %1844 = vmatprep.subr.mxu0 0.0
    %1845 = vmatpush1.msra.mxu0 0.0
    %1846 = vmatprep.subr.mxu0 0.0
    %1847 = vmatpush1.msra.mxu0 0.0
    %1848 = vmatprep.subr.mxu0 0.0
    %1849 = vmatpush1.msra.mxu0 0.0
    %1850 = vmatprep.mubr.f32.mxu0 0.0
    %1851 = vmatmul.mubr.f32.gmra.mrb[0].mxu0 %v1781
    %v1852 = vpop.f32.mrb[0].mxu0
    %v1853 = vadd.f32 0.0, %v1852
    %v1854 = vpop.f32.mrb[0].mxu0
    %1855 = vmatprep.mubr.f32.mxu0 0.0
    %1856 = vmatmul.mubr.f32.gmra.mrb[0].mxu0 %v1784
    %v1857 = vpop.f32.mrb[0].mxu0
    %v1858 = vadd.f32 0.0, %v1857
    %v1859 = vpop.f32.mrb[0].mxu0
    %1860 = vdwg.mxu0
    %v1862 = vsel %vm360, %v1463, 0
    %v1865 = vsel %vm360, %v1539, 0
    %1867 = vmatprep.subr.mxu0 0.0
    %1868 = vmatpush1.msra.mxu0 %v1696
    %1869 = vmatprep.subr.mxu0 0.0
    %1870 = vmatpush1.msra.mxu0 0.0
    %1871 = vmatprep.subr.mxu0 0.0
    %1872 = vmatpush1.msra.mxu0 0.0
    %1873 = vmatprep.subr.mxu0 0.0
    %1874 = vmatpush1.msra.mxu0 0.0
    %1875 = vmatprep.subr.mxu0 0.0
    %1876 = vmatpush1.msra.mxu0 0.0
    %1877 = vmatprep.subr.mxu0 0.0
    %1878 = vmatpush1.msra.mxu0 0.0
    %1879 = vmatprep.subr.mxu0 0.0
    %1880 = vmatpush1.msra.mxu0 0.0
    %1881 = vmatprep.subr.mxu0 0.0
    %1882 = vmatpush1.msra.mxu0 0.0
    %1883 = vmatprep.subr.mxu0 0.0
    %1884 = vmatpush1.msra.mxu0 0.0
    %1885 = vmatprep.subr.mxu0 0.0
    %1886 = vmatpush1.msra.mxu0 0.0
    %1887 = vmatprep.subr.mxu0 0.0
    %1888 = vmatpush1.msra.mxu0 0.0
    %1889 = vmatprep.subr.mxu0 0.0
    %1890 = vmatpush1.msra.mxu0 0.0
    %1891 = vmatprep.subr.mxu0 0.0
    %1892 = vmatpush1.msra.mxu0 0.0
    %1893 = vmatprep.subr.mxu0 0.0
    %1894 = vmatpush1.msra.mxu0 0.0
    %1895 = vmatprep.subr.mxu0 0.0
    %1896 = vmatpush1.msra.mxu0 0.0
    %1897 = vmatprep.subr.mxu0 0.0
    %1898 = vmatpush1.msra.mxu0 0.0
    %1899 = vmatprep.subr.mxu0 0.0
    %1900 = vmatpush1.msra.mxu0 0.0
    %1901 = vmatprep.subr.mxu0 0.0
    %1902 = vmatpush1.msra.mxu0 0.0
    %1903 = vmatprep.subr.mxu0 0.0
    %1904 = vmatpush1.msra.mxu0 0.0
    %1905 = vmatprep.subr.mxu0 0.0
    %1906 = vmatpush1.msra.mxu0 0.0
    %1907 = vmatprep.subr.mxu0 0.0
    %1908 = vmatpush1.msra.mxu0 0.0
    %1909 = vmatprep.subr.mxu0 0.0
    %1910 = vmatpush1.msra.mxu0 0.0
    %1911 = vmatprep.subr.mxu0 0.0
    %1912 = vmatpush1.msra.mxu0 0.0
    %1913 = vmatprep.subr.mxu0 0.0
    %1914 = vmatpush1.msra.mxu0 0.0
    %1915 = vmatprep.subr.mxu0 0.0
    %1916 = vmatpush1.msra.mxu0 0.0
    %1917 = vmatprep.subr.mxu0 0.0
    %1918 = vmatpush1.msra.mxu0 0.0
    %1919 = vmatprep.subr.mxu0 0.0
    %1920 = vmatpush1.msra.mxu0 0.0
    %1921 = vmatprep.subr.mxu0 0.0
    %1922 = vmatpush1.msra.mxu0 0.0
    %1923 = vmatprep.subr.mxu0 0.0
    %1924 = vmatpush1.msra.mxu0 0.0
    %1925 = vmatprep.subr.mxu0 0.0
    %1926 = vmatpush1.msra.mxu0 0.0
    %1927 = vmatprep.subr.mxu0 0.0
    %1928 = vmatpush1.msra.mxu0 0.0
    %1929 = vmatprep.subr.mxu0 0.0
    %1930 = vmatpush1.msra.mxu0 0.0
    %1931 = vmatprep.mubr.f32.mxu0 0.0
    %1932 = vmatmul.mubr.f32.gmra.mrb[0].mxu0 %v1862
    %v1933 = vpop.f32.mrb[0].mxu0
    %v1934 = vadd.f32 0.0, %v1933
    %v1935 = vpop.f32.mrb[0].mxu0
    %1936 = vmatprep.mubr.f32.mxu0 0.0
    %1937 = vmatmul.mubr.f32.gmra.mrb[0].mxu0 %v1865
    %v1938 = vpop.f32.mrb[0].mxu0
    %v1939 = vadd.f32 0.0, %v1938
    %v1940 = vpop.f32.mrb[0].mxu0
    %1941 = vdwg.mxu0
    %v1943 = vsel %vm360, %v1615, 0
    %v1946 = vsel %vm360, %v1691, 0
    %1948 = vmatprep.subr.mxu0 0.0
    %1949 = vmatpush1.msra.mxu0 %v1697
    %1950 = vmatprep.subr.mxu0 0.0
    %1951 = vmatpush1.msra.mxu0 0.0
    %1952 = vmatprep.subr.mxu0 0.0
    %1953 = vmatpush1.msra.mxu0 0.0
    %1954 = vmatprep.subr.mxu0 0.0
    %1955 = vmatpush1.msra.mxu0 0.0
    %1956 = vmatprep.subr.mxu0 0.0
    %1957 = vmatpush1.msra.mxu0 0.0
    %1958 = vmatprep.subr.mxu0 0.0
    %1959 = vmatpush1.msra.mxu0 0.0
    %1960 = vmatprep.subr.mxu0 0.0
    %1961 = vmatpush1.msra.mxu0 0.0
    %1962 = vmatprep.subr.mxu0 0.0
    %1963 = vmatpush1.msra.mxu0 0.0
    %1964 = vmatprep.subr.mxu0 0.0
    %1965 = vmatpush1.msra.mxu0 0.0
    %1966 = vmatprep.subr.mxu0 0.0
    %1967 = vmatpush1.msra.mxu0 0.0
    %1968 = vmatprep.subr.mxu0 0.0
    %1969 = vmatpush1.msra.mxu0 0.0
    %1970 = vmatprep.subr.mxu0 0.0
    %1971 = vmatpush1.msra.mxu0 0.0
    %1972 = vmatprep.subr.mxu0 0.0
    %1973 = vmatpush1.msra.mxu0 0.0
    %1974 = vmatprep.subr.mxu0 0.0
    %1975 = vmatpush1.msra.mxu0 0.0
    %1976 = vmatprep.subr.mxu0 0.0
    %1977 = vmatpush1.msra.mxu0 0.0
    %1978 = vmatprep.subr.mxu0 0.0
    %1979 = vmatpush1.msra.mxu0 0.0
    %1980 = vmatprep.subr.mxu0 0.0
    %1981 = vmatpush1.msra.mxu0 0.0
    %1982 = vmatprep.subr.mxu0 0.0
    %1983 = vmatpush1.msra.mxu0 0.0
    %1984 = vmatprep.subr.mxu0 0.0
    %1985 = vmatpush1.msra.mxu0 0.0
    %1986 = vmatprep.subr.mxu0 0.0
    %1987 = vmatpush1.msra.mxu0 0.0
    %1988 = vmatprep.subr.mxu0 0.0
    %1989 = vmatpush1.msra.mxu0 0.0
    %1990 = vmatprep.subr.mxu0 0.0
    %1991 = vmatpush1.msra.mxu0 0.0
    %1992 = vmatprep.subr.mxu0 0.0
    %1993 = vmatpush1.msra.mxu0 0.0
    %1994 = vmatprep.subr.mxu0 0.0
    %1995 = vmatpush1.msra.mxu0 0.0
    %1996 = vmatprep.subr.mxu0 0.0
    %1997 = vmatpush1.msra.mxu0 0.0
    %1998 = vmatprep.subr.mxu0 0.0
    %1999 = vmatpush1.msra.mxu0 0.0
    %2000 = vmatprep.subr.mxu0 0.0
    %2001 = vmatpush1.msra.mxu0 0.0
    %2002 = vmatprep.subr.mxu0 0.0
    %2003 = vmatpush1.msra.mxu0 0.0
    %2004 = vmatprep.subr.mxu0 0.0
    %2005 = vmatpush1.msra.mxu0 0.0
    %2006 = vmatprep.subr.mxu0 0.0
    %2007 = vmatpush1.msra.mxu0 0.0
    %2008 = vmatprep.subr.mxu0 0.0
    %2009 = vmatpush1.msra.mxu0 0.0
    %2010 = vmatprep.subr.mxu0 0.0
    %2011 = vmatpush1.msra.mxu0 0.0
    %2012 = vmatprep.mubr.f32.mxu0 0.0
    %2013 = vmatmul.mubr.f32.gmra.mrb[0].mxu0 %v1943
    %v2014 = vpop.f32.mrb[0].mxu0
    %v2015 = vadd.f32 0.0, %v2014
    %v2016 = vpop.f32.mrb[0].mxu0
    %2017 = vmatprep.mubr.f32.mxu0 0.0
    %2018 = vmatmul.mubr.f32.gmra.mrb[0].mxu0 %v1946
    %v2019 = vpop.f32.mrb[0].mxu0
    %v2020 = vadd.f32 0.0, %v2019
    %v2021 = vpop.f32.mrb[0].mxu0
    %2022 = vdwg.mxu0
    %v2023 = vadd.f32 %v1772, %v1853
    %v2024 = vadd.f32 %v1777, %v1858
    %v2025 = vadd.f32 %v2023, %v1934
    %v2026 = vadd.f32 %v2024, %v1939
    %v2027 = vadd.f32 %v2025, %v2015
    %v2028 = vadd.f32 %v2026, %v2020
    %v2029 = vlaneseq
    %v2030 = vshrl.u32 %v2029, 7
    %v2031 = vsub.s32 0, %v2030
    %v2032 = vrot.slane %v1698, %v2031
    %v2033 = vadd.f32 %v2027, %v2032
    %v2034 = vadd.f32 %v2028, %v2032
    %2035 = vst [vmem:[#allocation2] sm:$0xff] %v2033
    %2036 = vst [vmem:[#allocation2 + $0x8] sm:$0xff] %v2034
    // Predicated region
    $region14: #{tpu_custom_call.1} parent=1 // pred_check
      _
    $region15: #{tpu_custom_call.1} parent=1 // pred_check_branch
      %2038 = sbr.rel (0) target = $region17
    $region16: #{tpu_custom_call.1} parent=1 // pred_region
      %s2040 = ssub.s32 256, 256
      %2041 = vsyncadd [#allocation3], %s2040
      %s2042 = sshll.u32 [#allocation2], 4
      %s2043 = int_to_ptr.vmem [resolvable:$true] %s2042
      %2048 = dma.vmem_to_hbm [thread:$0]  %s2043, 256, %s3, [#allocation3], 128, 128, 8
    $region17: #{tpu_custom_call.1} parent=1 // pred_fallthru
      _
    // Predicated region
    $region18: #{tpu_custom_call.1} parent=1 // pred_check
      _
    $region19: #{tpu_custom_call.1} parent=1 // pred_check_branch
      %2050 = sbr.rel (0) target = $region21
    $region20: #{tpu_custom_call.1} parent=1 // pred_region
      %2051 = dma.done [#allocation3], 256
    $region21: #{tpu_custom_call.1} parent=1 // pred_fallthru
      _
    %2052 = vsyncpa [#allocation3], 1

</llo_original>
